<compile_context>
chip_gen: v6e
topology: v6e:2x2x1
jax: 0.10.0
libtpu: 0.0.40
codegen_flags: <defaults>
</compile_context>

<pallas_src>
import numpy as np
import jax
import jax.numpy as jnp
from jax.experimental import pallas as pl
from jax.experimental.pallas import tpu as pltpu

NUM_HEADS = 4
NEG_INF = np.float32(np.finfo(np.float32).min)


def _round_up(x, m):
    return (x + m - 1) // m * m


def _make_kernel(fold):
    def neighbor_attention_kernel(hv_ref, he_ref, mask_ref,
                                  wq_ref, wk_ref, wv_ref, wo_ref,
                                  p_ref, out_ref):
        TM, K, C = he_ref.shape
        H = hv_ref.shape[1]

        hv = hv_ref[...]                          # (TM, H)    bf16
        he2 = he_ref[...].reshape(TM * K, C)      # (TM*K, C)  bf16
        mask = mask_ref[...]                      # (TM, K)    bf16 {0,1}

        # Projections (bf16 x bf16 MXU, f32 accumulate). 1/sqrt(d) pre-folded into Wq.
        q = jnp.dot(hv, wq_ref[...], preferred_element_type=jnp.float32)            # (TM, H)
        k = jnp.dot(he2, wk_ref[...],
                    preferred_element_type=jnp.float32).reshape(TM, K, H)            # (TM, K, H)
        v = jnp.dot(he2, wv_ref[...],
                    preferred_element_type=jnp.float32).reshape(TM, K, H)            # (TM, K, H)

        # Per-head logits replicated to all H lanes of each head block via the single
        # (H, H) block-indicator P (bf16 MXU pass, f32 accumulate).
        qk = q[:, None, :] * k                                                       # (TM, K, H)
        scores = jnp.dot(qk.reshape(TM * K, H).astype(jnp.bfloat16), p_ref[...],
                         preferred_element_type=jnp.float32).reshape(TM, K, H)

        # Numerically stable masked softmax over K at full H lanes.
        keep = mask[:, :, None] > 0                                                  # (TM, K, 1)
        scores = jnp.where(keep, scores, NEG_INF)
        m_max = jnp.max(scores, axis=1, keepdims=True)                               # (TM, 1, H)
        e = jnp.exp(scores - m_max)
        denom = jnp.sum(e, axis=1, keepdims=True)
        attend = e * pl.reciprocal(denom, approx=True)                               # EUP divide
        attend = jnp.where(keep, attend, 0.0)                                        # re-mask

        # Weight V and reduce over K (sublane reduce), then output projection.
        o = jnp.sum(attend * v, axis=1)                                              # (TM, H) f32
        out = jnp.dot(o.astype(wo_ref.dtype), wo_ref[...],
                      preferred_element_type=jnp.float32)
        outb = out.astype(out_ref.dtype)                                             # (TM, H) bf16

        if fold == 1:
            out_ref[...] = outb
        else:
            # Lane-dense fold: lane group f of the slab holds rows [f*rows, (f+1)*rows).
            rows = TM // fold
            out_ref[...] = jnp.concatenate(
                [outb[f * rows:(f + 1) * rows, :] for f in range(fold)], axis=1)

    return neighbor_attention_kernel


def neighbor_attention(h_V, h_E, mask_attend, Wq, Wk, Wv, Wo,
                       *, tile_m=512, n_heads=NUM_HEADS):
    B, N, H = h_V.shape
    _, _, K, C = h_E.shape
    M = B * N
    d = H // n_heads

    # Lane fold factor for the output slab (H=32 -> 4 -> 128 dense lanes).
    fold = 128 // H if (H <= 128 and 128 % H == 0) else 1
    row_align = 8 * fold

    # Clamp tile_m: fold/sublane aligned, no over-padding of tiny inputs, and at least
    # 2 grid steps for medium/large M so both v7x TensorCores get work.
    half = _round_up(-(-M // 2), row_align)
    tile_m = _round_up(max(row_align, min(tile_m, half)), row_align)
    M_pad = _round_up(M, tile_m)
    grid = M_pad // tile_m

    hv = h_V.reshape(M, H).astype(jnp.bfloat16)
    he = h_E.reshape(M, K, C).astype(jnp.bfloat16)
    mask = mask_attend.reshape(M, K).astype(jnp.bfloat16)
    if M_pad != M:
        pad = M_pad - M
        hv = jnp.pad(hv, ((0, pad), (0, 0)))
        he = jnp.pad(he, ((0, pad), (0, 0), (0, 0)))
        mask = jnp.pad(mask, ((0, pad), (0, 0)))       # zero mask -> zero output rows

    # bf16 weights; all dots accumulate in f32 inside the kernel.
    wq = (Wq * np.float32(1.0 / np.sqrt(d))).astype(jnp.bfloat16)   # fold 1/sqrt(d)
    wk = Wk.astype(jnp.bfloat16)
    wv = Wv.astype(jnp.bfloat16)
    wo = Wo.astype(jnp.bfloat16)

    # Per-head block matrix: P[j, h] = 1 iff lanes j and h belong to the same head.
    heads = jnp.arange(H) // d
    p = (heads[:, None] == heads[None, :]).astype(jnp.bfloat16)     # (H, H)

    out_cols = fold * H
    out_slab = pl.pallas_call(
        _make_kernel(fold),
        out_shape=jax.ShapeDtypeStruct((M_pad // fold, out_cols), jnp.bfloat16),
        grid_spec=pltpu.PrefetchScalarGridSpec(
            num_scalar_prefetch=0,
            grid=(grid,),
            in_specs=[
                pl.BlockSpec((tile_m, H), lambda i: (i, 0)),           # h_V
                pl.BlockSpec((tile_m, K, C), lambda i: (i, 0, 0)),     # h_E
                pl.BlockSpec((tile_m, K), lambda i: (i, 0)),           # mask (bf16)
                pl.BlockSpec((H, H), lambda i: (0, 0)),                # Wq (scaled)
                pl.BlockSpec((C, H), lambda i: (0, 0)),                # Wk
                pl.BlockSpec((C, H), lambda i: (0, 0)),                # Wv
                pl.BlockSpec((H, H), lambda i: (0, 0)),                # Wo
                pl.BlockSpec((H, H), lambda i: (0, 0)),                # P head block matrix
            ],
            out_specs=pl.BlockSpec((tile_m // fold, out_cols), lambda i: (i, 0)),
        ),
        compiler_params=pltpu.CompilerParams(
            dimension_semantics=("parallel",),
            vmem_limit_bytes=48 * 1024 * 1024,
        ),
    )(hv, he, mask, wq, wk, wv, wo, p)

    # Cheap wrapper-side unfold of the lane-dense slab back to (M_pad, H).
    if fold == 1:
        out = out_slab
    else:
        rows = tile_m // fold
        out = (out_slab.reshape(grid, rows, fold, H)
               .transpose(0, 2, 1, 3)
               .reshape(M_pad, H))
    return out[:M].astype(jnp.float32).reshape(B, N, H)


def reference_forward(h_V, h_E, mask_attend, Wq, Wk, Wv, Wo, n_heads=NUM_HEADS):
    """Plain-JAX (f32) mirror of the PyTorch forward (for validation)."""
    B, N, H = h_V.shape
    K = h_E.shape[2]
    d = H // n_heads
    Q = (h_V @ Wq).reshape(B, N, n_heads, d)
    Kp = (h_E @ Wk).reshape(B, N, K, n_heads, d)
    V = (h_E @ Wv).reshape(B, N, K, n_heads, d)
    logits = jnp.einsum('bnhd,bnkhd->bnhk', Q, Kp) / np.sqrt(d)      # (B,N,heads,K)
    mask = jnp.broadcast_to(mask_attend[:, :, None, :], logits.shape)
    logits = jnp.where(mask > 0, logits, NEG_INF)
    attend = jax.nn.softmax(logits, axis=-1)
    attend = mask * attend
    upd = jnp.einsum('bnhk,bnkhd->bnhd', attend, V).reshape(B, N, H)
    return upd @ Wo


if __name__ == "__main__":
    B, N, K = 2, 8, 8
    H, C = 32, 48          # num_hidden, num_in

    key = jax.random.PRNGKey(0)
    k1, k2, k3, k4, k5, k6, k7 = jax.random.split(key, 7)

    h_V = jax.random.normal(k1, (B, N, H), dtype=jnp.float32)
    h_E = jax.random.normal(k2, (B, N, K, C), dtype=jnp.float32)
    mask_attend = (jax.random.uniform(k3, (B, N, K)) > 0.3).astype(jnp.float32)

    # Deterministic synthetic parameters (nn.Linear, bias=False), stored as [in, out].
    Wq = 0.1 * jax.random.normal(k4, (H, H), dtype=jnp.float32)
    Wk = 0.1 * jax.random.normal(k5, (C, H), dtype=jnp.float32)
    Wv = 0.1 * jax.random.normal(k6, (C, H), dtype=jnp.float32)
    Wo = 0.1 * jax.random.normal(k7, (H, H), dtype=jnp.float32)

    out = neighbor_attention(h_V, h_E, mask_attend, Wq, Wk, Wv, Wo)
    out = jax.block_until_ready(out)

    ref = reference_forward(h_V, h_E, mask_attend, Wq, Wk, Wv, Wo)
    # bf16 activations/weights/output in the kernel -> relaxed tolerance vs. f32 ref.
    np.testing.assert_allclose(np.asarray(out), np.asarray(ref), rtol=2e-2, atol=2e-2)

    print("KERNEL_OK")
</pallas_src>

<mosaic_0001>
module attributes {stable_mosaic.version = 11 : i64} {
  func.func @neighbor_attention_kernel(%arg0: i32, %arg1: memref<32x32xbf16, #tpu.memory_space<vmem>>, %arg2: memref<32x8x48xbf16, #tpu.memory_space<vmem>>, %arg3: memref<32x8xbf16, #tpu.memory_space<vmem>>, %arg4: memref<32x32xbf16, #tpu.memory_space<vmem>>, %arg5: memref<48x32xbf16, #tpu.memory_space<vmem>>, %arg6: memref<48x32xbf16, #tpu.memory_space<vmem>>, %arg7: memref<32x32xbf16, #tpu.memory_space<vmem>>, %arg8: memref<32x32xbf16, #tpu.memory_space<vmem>>, %arg9: memref<8x128xbf16, #tpu.memory_space<vmem>>) attributes {dimension_semantics = [#tpu.dimension_semantics<parallel>], iteration_bounds = array<i64: 1>, scalar_prefetch = 0 : i64, scratch_operands = 0 : i64, tpu.core_type = #tpu.core_type<tc>, window_params = [{transform_indices = @transform_0, window_bounds = array<i64: 32, 32>}, {transform_indices = @transform_1, window_bounds = array<i64: 32, 8, 48>}, {transform_indices = @transform_2, window_bounds = array<i64: 32, 8>}, {pipeline_mode = #tpu.pipeline_mode<synchronous>, transform_indices = @transform_3, window_bounds = array<i64: 32, 32>}, {pipeline_mode = #tpu.pipeline_mode<synchronous>, transform_indices = @transform_4, window_bounds = array<i64: 48, 32>}, {pipeline_mode = #tpu.pipeline_mode<synchronous>, transform_indices = @transform_5, window_bounds = array<i64: 48, 32>}, {pipeline_mode = #tpu.pipeline_mode<synchronous>, transform_indices = @transform_6, window_bounds = array<i64: 32, 32>}, {pipeline_mode = #tpu.pipeline_mode<synchronous>, transform_indices = @transform_7, window_bounds = array<i64: 32, 32>}, {transform_indices = @transform_8, window_bounds = array<i64: 8, 128>}]} {
    %c0 = arith.constant 0 : index
    %c0_0 = arith.constant 0 : index
    %0 = vector.load %arg1[%c0, %c0_0] : memref<32x32xbf16, #tpu.memory_space<vmem>>, vector<32x32xbf16>
    %c0_1 = arith.constant 0 : index
    %c0_2 = arith.constant 0 : index
    %c0_3 = arith.constant 0 : index
    %1 = vector.load %arg2[%c0_1, %c0_2, %c0_3] : memref<32x8x48xbf16, #tpu.memory_space<vmem>>, vector<32x8x48xbf16>
    %2 = vector.shape_cast %1 : vector<32x8x48xbf16> to vector<256x48xbf16>
    %c0_4 = arith.constant 0 : index
    %c0_5 = arith.constant 0 : index
    %3 = vector.load %arg3[%c0_4, %c0_5] : memref<32x8xbf16, #tpu.memory_space<vmem>>, vector<32x8xbf16>
    %c0_6 = arith.constant 0 : index
    %c0_7 = arith.constant 0 : index
    %4 = vector.load %arg4[%c0_6, %c0_7] : memref<32x32xbf16, #tpu.memory_space<vmem>>, vector<32x32xbf16>
    %cst = arith.constant dense<0.000000e+00> : vector<32x32xf32>
    %5 = tpu.matmul %0, %4, %cst {dimension_numbers = #tpu.dot_dimension_numbers<[1], [0], [0], [1], [0, 0, 1, 1], [], []>} : vector<32x32xbf16>, vector<32x32xbf16>, vector<32x32xf32> -> vector<32x32xf32>
    %c0_8 = arith.constant 0 : index
    %c0_9 = arith.constant 0 : index
    %6 = vector.load %arg5[%c0_8, %c0_9] : memref<48x32xbf16, #tpu.memory_space<vmem>>, vector<48x32xbf16>
    %cst_10 = arith.constant dense<0.000000e+00> : vector<256x32xf32>
    %7 = tpu.matmul %2, %6, %cst_10 {dimension_numbers = #tpu.dot_dimension_numbers<[1], [0], [0], [1], [0, 0, 1, 1], [], []>} : vector<256x48xbf16>, vector<48x32xbf16>, vector<256x32xf32> -> vector<256x32xf32>
    %8 = vector.shape_cast %7 : vector<256x32xf32> to vector<32x8x32xf32>
    %c0_11 = arith.constant 0 : index
    %c0_12 = arith.constant 0 : index
    %9 = vector.load %arg6[%c0_11, %c0_12] : memref<48x32xbf16, #tpu.memory_space<vmem>>, vector<48x32xbf16>
    %cst_13 = arith.constant dense<0.000000e+00> : vector<256x32xf32>
    %10 = tpu.matmul %2, %9, %cst_13 {dimension_numbers = #tpu.dot_dimension_numbers<[1], [0], [0], [1], [0, 0, 1, 1], [], []>} : vector<256x48xbf16>, vector<48x32xbf16>, vector<256x32xf32> -> vector<256x32xf32>
    %11 = vector.shape_cast %10 : vector<256x32xf32> to vector<32x8x32xf32>
    %12 = vector.shape_cast %5 : vector<32x32xf32> to vector<32x1x32xf32>
    %13 = vector.broadcast %12 : vector<32x1x32xf32> to vector<32x8x32xf32>
    %14 = arith.mulf %13, %8 : vector<32x8x32xf32>
    %15 = vector.shape_cast %14 : vector<32x8x32xf32> to vector<256x32xf32>
    %16 = arith.truncf %15 : vector<256x32xf32> to vector<256x32xbf16>
    %c0_14 = arith.constant 0 : index
    %c0_15 = arith.constant 0 : index
    %17 = vector.load %arg8[%c0_14, %c0_15] : memref<32x32xbf16, #tpu.memory_space<vmem>>, vector<32x32xbf16>
    %cst_16 = arith.constant dense<0.000000e+00> : vector<256x32xf32>
    %18 = tpu.matmul %16, %17, %cst_16 {dimension_numbers = #tpu.dot_dimension_numbers<[1], [0], [0], [1], [0, 0, 1, 1], [], []>} : vector<256x32xbf16>, vector<32x32xbf16>, vector<256x32xf32> -> vector<256x32xf32>
    %19 = vector.shape_cast %18 : vector<256x32xf32> to vector<32x8x32xf32>
    %20 = vector.shape_cast %3 : vector<32x8xbf16> to vector<32x8x1xbf16>
    %cst_17 = arith.constant 0.000000e+00 : bf16
    %21 = vector.broadcast %cst_17 : bf16 to vector<32x8x1xbf16>
    %22 = arith.cmpf ogt, %20, %21 : vector<32x8x1xbf16>
    %cst_18 = arith.constant -3.40282347E+38 : f32
    %23 = vector.shape_cast %22 : vector<32x8x1xi1> to vector<32x8x1xi1>
    %24 = vector.broadcast %23 : vector<32x8x1xi1> to vector<32x8x32xi1>
    %25 = vector.broadcast %cst_18 : f32 to vector<32x8x32xf32>
    %26 = arith.select %24, %19, %25 : vector<32x8x32xi1>, vector<32x8x32xf32>
    %cst_19 = arith.constant dense<0xFF800000> : vector<32x32xf32>
    %27 = vector.multi_reduction <maximumf>, %26, %cst_19 [1] : vector<32x8x32xf32> to vector<32x32xf32>
    %28 = vector.shape_cast %27 : vector<32x32xf32> to vector<32x1x32xf32>
    %29 = vector.broadcast %28 : vector<32x1x32xf32> to vector<32x8x32xf32>
    %30 = arith.subf %26, %29 : vector<32x8x32xf32>
    %31 = math.exp %30 : vector<32x8x32xf32>
    %cst_20 = arith.constant dense<0.000000e+00> : vector<32x32xf32>
    %32 = vector.multi_reduction <add>, %31, %cst_20 [1] : vector<32x8x32xf32> to vector<32x32xf32>
    %33 = vector.shape_cast %32 : vector<32x32xf32> to vector<32x1x32xf32>
    %34 = tpu.reciprocal %33 {approx = true} : vector<32x1x32xf32> -> vector<32x1x32xf32>
    %35 = vector.broadcast %34 : vector<32x1x32xf32> to vector<32x8x32xf32>
    %36 = arith.mulf %31, %35 : vector<32x8x32xf32>
    %cst_21 = arith.constant 0.000000e+00 : f32
    %37 = vector.shape_cast %22 : vector<32x8x1xi1> to vector<32x8x1xi1>
    %38 = vector.broadcast %37 : vector<32x8x1xi1> to vector<32x8x32xi1>
    %39 = vector.broadcast %cst_21 : f32 to vector<32x8x32xf32>
    %40 = arith.select %38, %36, %39 : vector<32x8x32xi1>, vector<32x8x32xf32>
    %41 = arith.mulf %40, %11 : vector<32x8x32xf32>
    %cst_22 = arith.constant dense<0.000000e+00> : vector<32x32xf32>
    %42 = vector.multi_reduction <add>, %41, %cst_22 [1] : vector<32x8x32xf32> to vector<32x32xf32>
    %43 = arith.truncf %42 : vector<32x32xf32> to vector<32x32xbf16>
    %c0_23 = arith.constant 0 : index
    %c0_24 = arith.constant 0 : index
    %44 = vector.load %arg7[%c0_23, %c0_24] : memref<32x32xbf16, #tpu.memory_space<vmem>>, vector<32x32xbf16>
    %cst_25 = arith.constant dense<0.000000e+00> : vector<32x32xf32>
    %45 = tpu.matmul %43, %44, %cst_25 {dimension_numbers = #tpu.dot_dimension_numbers<[1], [0], [0], [1], [0, 0, 1, 1], [], []>} : vector<32x32xbf16>, vector<32x32xbf16>, vector<32x32xf32> -> vector<32x32xf32>
    %46 = arith.truncf %45 : vector<32x32xf32> to vector<32x32xbf16>
    %47 = vector.extract_strided_slice %46 {offsets = [0, 0], sizes = [8, 32], strides = [1, 1]} : vector<32x32xbf16> to vector<8x32xbf16>
    %48 = vector.extract_strided_slice %46 {offsets = [8, 0], sizes = [8, 32], strides = [1, 1]} : vector<32x32xbf16> to vector<8x32xbf16>
    %49 = vector.extract_strided_slice %46 {offsets = [16, 0], sizes = [8, 32], strides = [1, 1]} : vector<32x32xbf16> to vector<8x32xbf16>
    %50 = vector.extract_strided_slice %46 {offsets = [24, 0], sizes = [8, 32], strides = [1, 1]} : vector<32x32xbf16> to vector<8x32xbf16>
    %51 = tpu.concatenate %47, %48, %49, %50 in 1 : vector<8x32xbf16>, vector<8x32xbf16>, vector<8x32xbf16>, vector<8x32xbf16> -> vector<8x128xbf16>
    %c0_26 = arith.constant 0 : index
    %c0_27 = arith.constant 0 : index
    %52 = vector.load %arg9[%c0_26, %c0_27] : memref<8x128xbf16, #tpu.memory_space<vmem>>, vector<8x128xbf16>
    tpu.vector_store %arg9[%c0_26, %c0_27], %51 {strides = array<i32>} : memref<8x128xbf16, #tpu.memory_space<vmem>>, vector<8x128xbf16>,
    return
  }
  func.func @transform_0(%arg0: i32) -> (i32, i32) {
    %c0_i32 = arith.constant 0 : i32
    %c0_i32_0 = arith.constant 0 : i32
    return %arg0, %c0_i32 : i32, i32
  }
  func.func @transform_1(%arg0: i32) -> (i32, i32, i32) {
    %c0_i32 = arith.constant 0 : i32
    %c0_i32_0 = arith.constant 0 : i32
    %c0_i32_1 = arith.constant 0 : i32
    return %arg0, %c0_i32, %c0_i32_0 : i32, i32, i32
  }
  func.func @transform_2(%arg0: i32) -> (i32, i32) {
    %c0_i32 = arith.constant 0 : i32
    %c0_i32_0 = arith.constant 0 : i32
    return %arg0, %c0_i32 : i32, i32
  }
  func.func @transform_3(%arg0: i32) -> (i32, i32) {
    %c0_i32 = arith.constant 0 : i32
    %c0_i32_0 = arith.constant 0 : i32
    %c0_i32_1 = arith.constant 0 : i32
    return %c0_i32, %c0_i32_0 : i32, i32
  }
  func.func @transform_4(%arg0: i32) -> (i32, i32) {
    %c0_i32 = arith.constant 0 : i32
    %c0_i32_0 = arith.constant 0 : i32
    %c0_i32_1 = arith.constant 0 : i32
    return %c0_i32, %c0_i32_0 : i32, i32
  }
  func.func @transform_5(%arg0: i32) -> (i32, i32) {
    %c0_i32 = arith.constant 0 : i32
    %c0_i32_0 = arith.constant 0 : i32
    %c0_i32_1 = arith.constant 0 : i32
    return %c0_i32, %c0_i32_0 : i32, i32
  }
  func.func @transform_6(%arg0: i32) -> (i32, i32) {
    %c0_i32 = arith.constant 0 : i32
    %c0_i32_0 = arith.constant 0 : i32
    %c0_i32_1 = arith.constant 0 : i32
    return %c0_i32, %c0_i32_0 : i32, i32
  }
  func.func @transform_7(%arg0: i32) -> (i32, i32) {
    %c0_i32 = arith.constant 0 : i32
    %c0_i32_0 = arith.constant 0 : i32
    %c0_i32_1 = arith.constant 0 : i32
    return %c0_i32, %c0_i32_0 : i32, i32
  }
  func.func @transform_8(%arg0: i32) -> (i32, i32) {
    %c0_i32 = arith.constant 0 : i32
    %c0_i32_0 = arith.constant 0 : i32
    return %arg0, %c0_i32 : i32, i32
  }
}

</mosaic_0001>

<llo_original>
// kernel: tpu_custom_call.1
$region0: #{tpu_custom_call.1}
  #allocation0 [shape = 'u32[]', space=smem, size = 0x4, offset = 0x4, fixed_abs, tag = 'smem constant byte address 0x4 - core index']
  #allocation1 [shape = 'u32[144,128]{1,0:T(1,128)}', space=vmem, size = 0x12000, scoped, tag = 'internal scratch']
  %s0 = inlined_call_operand.vmem [shape: bf16[32,32], index: 0, kind: input, shape index: {}]
  %s1 = inlined_call_operand.hbm [shape: bf16[32,8,48], index: 1, kind: input, shape index: {}]
  %s2 = inlined_call_operand.vmem [shape: bf16[32,8], index: 2, kind: input, shape index: {}]
  %s3 = inlined_call_operand.vmem [shape: bf16[32,32], index: 3, kind: input, shape index: {}]
  %s4 = inlined_call_operand.vmem [shape: bf16[48,32], index: 4, kind: input, shape index: {}]
  %s5 = inlined_call_operand.vmem [shape: bf16[48,32], index: 5, kind: input, shape index: {}]
  %s6 = inlined_call_operand.vmem [shape: bf16[32,32], index: 6, kind: input, shape index: {}]
  %s7 = inlined_call_operand.vmem [shape: bf16[32,32], index: 7, kind: input, shape index: {}]
  %s8 = inlined_call_operand.hbm [shape: bf16[8,128], index: 8, kind: output, shape index: {}]
  %s9 = sld [smem:[#allocation0]]
  $region46: #{tpu_custom_call.1} parent=0
    _
  %s11 = ssub.s32 1, %s9
  %s12 = scalar_select 0, %s11, %s9
  $region1: #{tpu_custom_call.1} parent=0
    #allocation2 [shape = 'u8[65536]{0}', space=vmem, size = 0x10000, scoped, tag = 'input window, operand 1, single buffered']
    #allocation3 [shape = 's32[1]{0}', space=sflag, size = 0x4, scoped, tag = 'scoped memory for tpu_custom_call.1']
    #allocation4 [shape = 's32[1]{0}', space=sflag, size = 0x4, scoped, tag = 'scoped memory for tpu_custom_call.1']
    #allocation5 [shape = 'u8[2048]{0}', space=vmem, size = 0x800, scoped, tag = 'output window, operand 0, single buffered']
    %13 = vsyncpa [#allocation3], 0
    %14 = vsyncpa [#allocation4], 0
    // Predicated region
    $region2: #{tpu_custom_call.1} parent=1 // pred_check
      _
    $region3: #{tpu_custom_call.1} parent=1 // pred_check_branch
      %16 = sbr.rel (0) target = $region5
    $region4: #{tpu_custom_call.1} parent=1 // pred_region
      _
    $region5: #{tpu_custom_call.1} parent=1 // pred_fallthru
      _
    // Predicated region
    $region6: #{tpu_custom_call.1} parent=1 // pred_check
      _
    $region7: #{tpu_custom_call.1} parent=1 // pred_check_branch
      %18 = sbr.rel (0) target = $region9
    $region8: #{tpu_custom_call.1} parent=1 // pred_region
      %s20 = ssub.s32 2048, 2048
      %21 = vsyncadd [#allocation3], %s20
      %s22 = sshll.u32 [#allocation2], 4
      %s23 = int_to_ptr.vmem [resolvable:$true] %s22
      %28 = dma.hbm_to_vmem [thread:$0]  %s1, 2048, %s23, [#allocation3], 64, 64, 4
    $region9: #{tpu_custom_call.1} parent=1 // pred_fallthru
      _
    // Predicated region
    $region10: #{tpu_custom_call.1} parent=1 // pred_check
      _
    $region11: #{tpu_custom_call.1} parent=1 // pred_check_branch
      %30 = sbr.rel (0) target = $region13
    $region12: #{tpu_custom_call.1} parent=1 // pred_region
      _
    $region13: #{tpu_custom_call.1} parent=1 // pred_fallthru
      _
    // Predicated region
    $region14: #{tpu_custom_call.1} parent=1 // pred_check
      _
    $region15: #{tpu_custom_call.1} parent=1 // pred_check_branch
      %32 = sbr.rel (0) target = $region17
    $region16: #{tpu_custom_call.1} parent=1 // pred_region
      _
    $region17: #{tpu_custom_call.1} parent=1 // pred_fallthru
      _
    // Predicated region
    $region18: #{tpu_custom_call.1} parent=1 // pred_check
      _
    $region19: #{tpu_custom_call.1} parent=1 // pred_check_branch
      %34 = sbr.rel (0) target = $region21
    $region20: #{tpu_custom_call.1} parent=1 // pred_region
      _
    $region21: #{tpu_custom_call.1} parent=1 // pred_fallthru
      _
    // Predicated region
    $region22: #{tpu_custom_call.1} parent=1 // pred_check
      _
    $region23: #{tpu_custom_call.1} parent=1 // pred_check_branch
      %36 = sbr.rel (0) target = $region25
    $region24: #{tpu_custom_call.1} parent=1 // pred_region
      _
    $region25: #{tpu_custom_call.1} parent=1 // pred_fallthru
      _
    // Predicated region
    $region26: #{tpu_custom_call.1} parent=1 // pred_check
      _
    $region27: #{tpu_custom_call.1} parent=1 // pred_check_branch
      %38 = sbr.rel (0) target = $region29
    $region28: #{tpu_custom_call.1} parent=1 // pred_region
      _
    $region29: #{tpu_custom_call.1} parent=1 // pred_fallthru
      _
    // Predicated region
    $region30: #{tpu_custom_call.1} parent=1 // pred_check
      _
    $region31: #{tpu_custom_call.1} parent=1 // pred_check_branch
      %40 = sbr.rel (0) target = $region33
    $region32: #{tpu_custom_call.1} parent=1 // pred_region
      _
    $region33: #{tpu_custom_call.1} parent=1 // pred_fallthru
      _
    // Predicated region
    $region34: #{tpu_custom_call.1} parent=1 // pred_check
      _
    $region35: #{tpu_custom_call.1} parent=1 // pred_check_branch
      %42 = sbr.rel (0) target = $region37
    $region36: #{tpu_custom_call.1} parent=1 // pred_region
      %43 = dma.done [#allocation3], 2048
    $region37: #{tpu_custom_call.1} parent=1 // pred_fallthru
      _
    %v47 = vld [vmem:[%s0] sm:$0xf]
    %v48 = vld [vmem:[%s0 + $0x4] sm:$0xf]
    %v49 = vld [vmem:[%s0 + $0x8] sm:$0xf]
    %v50 = vld [vmem:[%s0 + $0xc] sm:$0xf]
    %v51 = vld [vmem:[#allocation2] sm:$0xf]
    %v52 = vld [vmem:[#allocation2 + $0x4] sm:$0xf]
    %v53 = vld [vmem:[#allocation2 + $0x8] sm:$0xf]
    %v54 = vld [vmem:[#allocation2 + $0xc] sm:$0xf]
    %v55 = vld [vmem:[#allocation2 + $0x10] sm:$0xf]
    %v56 = vld [vmem:[#allocation2 + $0x14] sm:$0xf]
    %v57 = vld [vmem:[#allocation2 + $0x18] sm:$0xf]
    %v58 = vld [vmem:[#allocation2 + $0x1c] sm:$0xf]
    %v59 = vld [vmem:[#allocation2 + $0x20] sm:$0xf]
    %v60 = vld [vmem:[#allocation2 + $0x24] sm:$0xf]
    %v61 = vld [vmem:[#allocation2 + $0x28] sm:$0xf]
    %v62 = vld [vmem:[#allocation2 + $0x2c] sm:$0xf]
    %v63 = vld [vmem:[#allocation2 + $0x30] sm:$0xf]
    %v64 = vld [vmem:[#allocation2 + $0x34] sm:$0xf]
    %v65 = vld [vmem:[#allocation2 + $0x38] sm:$0xf]
    %v66 = vld [vmem:[#allocation2 + $0x3c] sm:$0xf]
    %v67 = vld [vmem:[#allocation2 + $0x40] sm:$0xf]
    %v68 = vld [vmem:[#allocation2 + $0x44] sm:$0xf]
    %v69 = vld [vmem:[#allocation2 + $0x48] sm:$0xf]
    %v70 = vld [vmem:[#allocation2 + $0x4c] sm:$0xf]
    %v71 = vld [vmem:[#allocation2 + $0x50] sm:$0xf]
    %v72 = vld [vmem:[#allocation2 + $0x54] sm:$0xf]
    %v73 = vld [vmem:[#allocation2 + $0x58] sm:$0xf]
    %v74 = vld [vmem:[#allocation2 + $0x5c] sm:$0xf]
    %v75 = vld [vmem:[#allocation2 + $0x60] sm:$0xf]
    %v76 = vld [vmem:[#allocation2 + $0x64] sm:$0xf]
    %v77 = vld [vmem:[#allocation2 + $0x68] sm:$0xf]
    %v78 = vld [vmem:[#allocation2 + $0x6c] sm:$0xf]
    %v79 = vld [vmem:[#allocation2 + $0x70] sm:$0xf]
    %v80 = vld [vmem:[#allocation2 + $0x74] sm:$0xf]
    %v81 = vld [vmem:[#allocation2 + $0x78] sm:$0xf]
    %v82 = vld [vmem:[#allocation2 + $0x7c] sm:$0xf]
    %v83 = vld [vmem:[%s2] sm:$0xf]
    %v84 = vld [vmem:[%s2 + $0x4] sm:$0xf]
    %v85 = vld [vmem:[%s2 + $0x8] sm:$0xf]
    %v86 = vld [vmem:[%s2 + $0xc] sm:$0xf]
    %v87 = vld [vmem:[%s3] sm:$0xf]
    %v88 = vld [vmem:[%s3 + $0x4] sm:$0xf]
    %v89 = vld [vmem:[%s3 + $0x8] sm:$0xf]
    %v90 = vld [vmem:[%s3 + $0xc] sm:$0xf]
    %v95 = vunpack.c.l.b16 %v47
    %v96 = vunpack.c.l.b16 %v48
    %v97 = vunpack.c.l.b16 %v49
    %v98 = vunpack.c.l.b16 %v50
    %v99 = vpack.c.b16 %v96, %v95
    %v100 = vpack.c.b16 %v98, %v97
    %v105 = vunpack.c.l.b16 %v87
    %v106 = vunpack.c.l.b16 %v88
    %v107 = vunpack.c.l.b16 %v89
    %v108 = vunpack.c.l.b16 %v90
    %v109 = vpack.c.b16 %v106, %v105
    %v110 = vpack.c.b16 %v108, %v107
    %vm113 = vcmask 261120
    %v115 = vsel %vm113, %v99, 0
    %v118 = vsel %vm113, %v100, 0
    %120 = vmatprep.subr.bf16.mxu0 0
    %121 = vmatpush1.bf16.msra.mxu0 0
    %122 = vmatprep.subr.bf16.mxu0 0
    %123 = vmatpush1.bf16.msra.mxu0 0
    %124 = vmatprep.subr.bf16.mxu0 0
    %125 = vmatpush1.bf16.msra.mxu0 0
    %126 = vmatprep.subr.bf16.mxu0 0
    %127 = vmatpush1.bf16.msra.mxu0 0
    %128 = vmatprep.subr.bf16.mxu0 0
    %129 = vmatpush1.bf16.msra.mxu0 0
    %130 = vmatprep.subr.bf16.mxu0 0
    %131 = vmatpush1.bf16.msra.mxu0 0
    %132 = vmatprep.subr.bf16.mxu0 0
    %133 = vmatpush1.bf16.msra.mxu0 %v110
    %134 = vmatprep.subr.bf16.mxu0 0
    %135 = vmatpush1.bf16.msra.mxu0 %v109
    %136 = vmatprep.subr.bf16.mxu0 0
    %137 = vmatpush2.bf16.msra.mxu0 0
    %138 = vmatprep.subr.bf16.mxu0 0
    %139 = vmatpush2.bf16.msra.mxu0 0
    %140 = vmatprep.subr.bf16.mxu0 0
    %141 = vmatpush2.bf16.msra.mxu0 0
    %142 = vmatprep.subr.bf16.mxu0 0
    %143 = vmatpush2.bf16.msra.mxu0 0
    %144 = vmatprep.subr.bf16.mxu0 0
    %145 = vmatpush2.bf16.msra.mxu0 0
    %146 = vmatprep.subr.bf16.mxu0 0
    %147 = vmatpush2.bf16.msra.mxu0 0
    %148 = vmatprep.subr.bf16.mxu0 0
    %149 = vmatpush2.bf16.msra.mxu0 0
    %150 = vmatprep.subr.bf16.mxu0 0
    %151 = vmatpush2.bf16.msra.mxu0 0
    %152 = vmatprep.mubr.bf16.mxu0 0
    %153 = vmatmul.mubr.bf16.gmra.mxu0 %v115
    %v154 = vpop.f32.mrf.mxu0
    %v155 = vadd.f32 0.0, %v154
    %v156 = vpop.f32.mrf.mxu0
    %v157 = vpop.f32.mrf.mxu0
    %v158 = vadd.f32 0.0, %v157
    %v159 = vpop.f32.mrf.mxu0
    %160 = vmatprep.mubr.bf16.mxu0 0
    %161 = vmatmul.mubr.bf16.gmra.mxu0 %v118
    %v162 = vpop.f32.mrf.mxu0
    %v163 = vadd.f32 0.0, %v162
    %v164 = vpop.f32.mrf.mxu0
    %v165 = vpop.f32.mrf.mxu0
    %v166 = vadd.f32 0.0, %v165
    %v167 = vpop.f32.mrf.mxu0
    %168 = vdwg.mxu0
    %v169 = vld [vmem:[%s4] sm:$0xf]
    %v170 = vld [vmem:[%s4 + $0x4] sm:$0xf]
    %v171 = vld [vmem:[%s4 + $0x8] sm:$0xf]
    %v172 = vld [vmem:[%s4 + $0xc] sm:$0xf]
    %v173 = vld [vmem:[%s4 + $0x10] sm:$0xf]
    %v174 = vld [vmem:[%s4 + $0x14] sm:$0xf]
    %v207 = vunpack.c.l.b16 %v51
    %v208 = vunpack.c.l.b16 %v52
    %v209 = vunpack.c.l.b16 %v53
    %v210 = vunpack.c.l.b16 %v54
    %v211 = vunpack.c.l.b16 %v55
    %v212 = vunpack.c.l.b16 %v56
    %v213 = vunpack.c.l.b16 %v57
    %v214 = vunpack.c.l.b16 %v58
    %v215 = vunpack.c.l.b16 %v59
    %v216 = vunpack.c.l.b16 %v60
    %v217 = vunpack.c.l.b16 %v61
    %v218 = vunpack.c.l.b16 %v62
    %v219 = vunpack.c.l.b16 %v63
    %v220 = vunpack.c.l.b16 %v64
    %v221 = vunpack.c.l.b16 %v65
    %v222 = vunpack.c.l.b16 %v66
    %v223 = vunpack.c.l.b16 %v67
    %v224 = vunpack.c.l.b16 %v68
    %v225 = vunpack.c.l.b16 %v69
    %v226 = vunpack.c.l.b16 %v70
    %v227 = vunpack.c.l.b16 %v71
    %v228 = vunpack.c.l.b16 %v72
    %v229 = vunpack.c.l.b16 %v73
    %v230 = vunpack.c.l.b16 %v74
    %v231 = vunpack.c.l.b16 %v75
    %v232 = vunpack.c.l.b16 %v76
    %v233 = vunpack.c.l.b16 %v77
    %v234 = vunpack.c.l.b16 %v78
    %v235 = vunpack.c.l.b16 %v79
    %v236 = vunpack.c.l.b16 %v80
    %v237 = vunpack.c.l.b16 %v81
    %v238 = vunpack.c.l.b16 %v82
    %v239 = vpack.c.b16 %v208, %v207
    %v240 = vpack.c.b16 %v210, %v209
    %v241 = vpack.c.b16 %v212, %v211
    %v242 = vpack.c.b16 %v214, %v213
    %v243 = vpack.c.b16 %v216, %v215
    %v244 = vpack.c.b16 %v218, %v217
    %v245 = vpack.c.b16 %v220, %v219
    %v246 = vpack.c.b16 %v222, %v221
    %v247 = vpack.c.b16 %v224, %v223
    %v248 = vpack.c.b16 %v226, %v225
    %v249 = vpack.c.b16 %v228, %v227
    %v250 = vpack.c.b16 %v230, %v229
    %v251 = vpack.c.b16 %v232, %v231
    %v252 = vpack.c.b16 %v234, %v233
    %v253 = vpack.c.b16 %v236, %v235
    %v254 = vpack.c.b16 %v238, %v237
    %v261 = vunpack.c.l.b16 %v169
    %v262 = vunpack.c.l.b16 %v170
    %v263 = vunpack.c.l.b16 %v171
    %v264 = vunpack.c.l.b16 %v172
    %v265 = vunpack.c.l.b16 %v173
    %v266 = vunpack.c.l.b16 %v174
    %v267 = vpack.c.b16 %v262, %v261
    %v268 = vpack.c.b16 %v264, %v263
    %v269 = vpack.c.b16 %v266, %v265
    %vm273 = vcmask 392192
    %v275 = vsel %vm273, %v239, 0
    %v278 = vsel %vm273, %v240, 0
    %v281 = vsel %vm273, %v241, 0
    %v284 = vsel %vm273, %v242, 0
    %v287 = vsel %vm273, %v243, 0
    %v290 = vsel %vm273, %v244, 0
    %v293 = vsel %vm273, %v245, 0
    %v296 = vsel %vm273, %v246, 0
    %v299 = vsel %vm273, %v247, 0
    %v302 = vsel %vm273, %v248, 0
    %v305 = vsel %vm273, %v249, 0
    %v308 = vsel %vm273, %v250, 0
    %v311 = vsel %vm273, %v251, 0
    %v314 = vsel %vm273, %v252, 0
    %v317 = vsel %vm273, %v253, 0
    %v320 = vsel %vm273, %v254, 0
    %322 = vmatprep.subr.bf16.mxu0 0
    %323 = vmatpush1.bf16.msra.mxu0 0
    %324 = vmatprep.subr.bf16.mxu0 0
    %325 = vmatpush1.bf16.msra.mxu0 0
    %326 = vmatprep.subr.bf16.mxu0 0
    %327 = vmatpush1.bf16.msra.mxu0 0
    %328 = vmatprep.subr.bf16.mxu0 0
    %329 = vmatpush1.bf16.msra.mxu0 0
    %330 = vmatprep.subr.bf16.mxu0 0
    %331 = vmatpush1.bf16.msra.mxu0 0
    %332 = vmatprep.subr.bf16.mxu0 0
    %333 = vmatpush1.bf16.msra.mxu0 %v269
    %334 = vmatprep.subr.bf16.mxu0 0
    %335 = vmatpush1.bf16.msra.mxu0 %v268
    %336 = vmatprep.subr.bf16.mxu0 0
    %337 = vmatpush1.bf16.msra.mxu0 %v267
    %338 = vmatprep.subr.bf16.mxu0 0
    %339 = vmatpush2.bf16.msra.mxu0 0
    %340 = vmatprep.subr.bf16.mxu0 0
    %341 = vmatpush2.bf16.msra.mxu0 0
    %342 = vmatprep.subr.bf16.mxu0 0
    %343 = vmatpush2.bf16.msra.mxu0 0
    %344 = vmatprep.subr.bf16.mxu0 0
    %345 = vmatpush2.bf16.msra.mxu0 0
    %346 = vmatprep.subr.bf16.mxu0 0
    %347 = vmatpush2.bf16.msra.mxu0 0
    %348 = vmatprep.subr.bf16.mxu0 0
    %349 = vmatpush2.bf16.msra.mxu0 0
    %350 = vmatprep.subr.bf16.mxu0 0
    %351 = vmatpush2.bf16.msra.mxu0 0
    %352 = vmatprep.subr.bf16.mxu0 0
    %353 = vmatpush2.bf16.msra.mxu0 0
    %354 = vmatprep.mubr.bf16.mxu0 0
    %355 = vmatmul.mubr.bf16.gmra.mxu0 %v275
    %v356 = vpop.f32.mrf.mxu0
    %v357 = vadd.f32 0.0, %v356
    %v358 = vpop.f32.mrf.mxu0
    %v359 = vpop.f32.mrf.mxu0
    %v360 = vadd.f32 0.0, %v359
    %v361 = vpop.f32.mrf.mxu0
    %362 = vmatprep.mubr.bf16.mxu0 0
    %363 = vmatmul.mubr.bf16.gmra.mxu0 %v278
    %v364 = vpop.f32.mrf.mxu0
    %v365 = vadd.f32 0.0, %v364
    %v366 = vpop.f32.mrf.mxu0
    %v367 = vpop.f32.mrf.mxu0
    %v368 = vadd.f32 0.0, %v367
    %v369 = vpop.f32.mrf.mxu0
    %370 = vmatprep.mubr.bf16.mxu0 0
    %371 = vmatmul.mubr.bf16.gmra.mxu0 %v281
    %v372 = vpop.f32.mrf.mxu0
    %v373 = vadd.f32 0.0, %v372
    %v374 = vpop.f32.mrf.mxu0
    %v375 = vpop.f32.mrf.mxu0
    %v376 = vadd.f32 0.0, %v375
    %v377 = vpop.f32.mrf.mxu0
    %378 = vmatprep.mubr.bf16.mxu0 0
    %379 = vmatmul.mubr.bf16.gmra.mxu0 %v284
    %v380 = vpop.f32.mrf.mxu0
    %v381 = vadd.f32 0.0, %v380
    %v382 = vpop.f32.mrf.mxu0
    %v383 = vpop.f32.mrf.mxu0
    %v384 = vadd.f32 0.0, %v383
    %v385 = vpop.f32.mrf.mxu0
    %386 = vmatprep.mubr.bf16.mxu0 0
    %387 = vmatmul.mubr.bf16.gmra.mxu0 %v287
    %v388 = vpop.f32.mrf.mxu0
    %v389 = vadd.f32 0.0, %v388
    %v390 = vpop.f32.mrf.mxu0
    %v391 = vpop.f32.mrf.mxu0
    %v392 = vadd.f32 0.0, %v391
    %v393 = vpop.f32.mrf.mxu0
    %394 = vmatprep.mubr.bf16.mxu0 0
    %395 = vmatmul.mubr.bf16.gmra.mxu0 %v290
    %v396 = vpop.f32.mrf.mxu0
    %v397 = vadd.f32 0.0, %v396
    %v398 = vpop.f32.mrf.mxu0
    %v399 = vpop.f32.mrf.mxu0
    %v400 = vadd.f32 0.0, %v399
    %v401 = vpop.f32.mrf.mxu0
    %402 = vmatprep.mubr.bf16.mxu0 0
    %403 = vmatmul.mubr.bf16.gmra.mxu0 %v293
    %v404 = vpop.f32.mrf.mxu0
    %v405 = vadd.f32 0.0, %v404
    %v406 = vpop.f32.mrf.mxu0
    %v407 = vpop.f32.mrf.mxu0
    %v408 = vadd.f32 0.0, %v407
    %v409 = vpop.f32.mrf.mxu0
    %410 = vmatprep.mubr.bf16.mxu0 0
    %411 = vmatmul.mubr.bf16.gmra.mxu0 %v296
    %v412 = vpop.f32.mrf.mxu0
    %v413 = vadd.f32 0.0, %v412
    %v414 = vpop.f32.mrf.mxu0
    %v415 = vpop.f32.mrf.mxu0
    %v416 = vadd.f32 0.0, %v415
    %v417 = vpop.f32.mrf.mxu0
    %418 = vmatprep.mubr.bf16.mxu0 0
    %419 = vmatmul.mubr.bf16.gmra.mxu0 %v299
    %v420 = vpop.f32.mrf.mxu0
    %v421 = vadd.f32 0.0, %v420
    %v422 = vpop.f32.mrf.mxu0
    %v423 = vpop.f32.mrf.mxu0
    %v424 = vadd.f32 0.0, %v423
    %v425 = vpop.f32.mrf.mxu0
    %426 = vmatprep.mubr.bf16.mxu0 0
    %427 = vmatmul.mubr.bf16.gmra.mxu0 %v302
    %v428 = vpop.f32.mrf.mxu0
    %v429 = vadd.f32 0.0, %v428
    %v430 = vpop.f32.mrf.mxu0
    %v431 = vpop.f32.mrf.mxu0
    %v432 = vadd.f32 0.0, %v431
    %v433 = vpop.f32.mrf.mxu0
    %434 = vmatprep.mubr.bf16.mxu0 0
    %435 = vmatmul.mubr.bf16.gmra.mxu0 %v305
    %v436 = vpop.f32.mrf.mxu0
    %v437 = vadd.f32 0.0, %v436
    %v438 = vpop.f32.mrf.mxu0
    %v439 = vpop.f32.mrf.mxu0
    %v440 = vadd.f32 0.0, %v439
    %v441 = vpop.f32.mrf.mxu0
    %442 = vmatprep.mubr.bf16.mxu0 0
    %443 = vmatmul.mubr.bf16.gmra.mxu0 %v308
    %v444 = vpop.f32.mrf.mxu0
    %v445 = vadd.f32 0.0, %v444
    %v446 = vpop.f32.mrf.mxu0
    %v447 = vpop.f32.mrf.mxu0
    %v448 = vadd.f32 0.0, %v447
    %v449 = vpop.f32.mrf.mxu0
    %450 = vmatprep.mubr.bf16.mxu0 0
    %451 = vmatmul.mubr.bf16.gmra.mxu0 %v311
    %v452 = vpop.f32.mrf.mxu0
    %v453 = vadd.f32 0.0, %v452
    %v454 = vpop.f32.mrf.mxu0
    %v455 = vpop.f32.mrf.mxu0
    %v456 = vadd.f32 0.0, %v455
    %v457 = vpop.f32.mrf.mxu0
    %458 = vmatprep.mubr.bf16.mxu0 0
    %459 = vmatmul.mubr.bf16.gmra.mxu0 %v314
    %v460 = vpop.f32.mrf.mxu0
    %v461 = vadd.f32 0.0, %v460
    %v462 = vpop.f32.mrf.mxu0
    %v463 = vpop.f32.mrf.mxu0
    %v464 = vadd.f32 0.0, %v463
    %v465 = vpop.f32.mrf.mxu0
    %466 = vmatprep.mubr.bf16.mxu0 0
    %467 = vmatmul.mubr.bf16.gmra.mxu0 %v317
    %v468 = vpop.f32.mrf.mxu0
    %v469 = vadd.f32 0.0, %v468
    %v470 = vpop.f32.mrf.mxu0
    %v471 = vpop.f32.mrf.mxu0
    %v472 = vadd.f32 0.0, %v471
    %v473 = vpop.f32.mrf.mxu0
    %474 = vmatprep.mubr.bf16.mxu0 0
    %475 = vmatmul.mubr.bf16.gmra.mxu0 %v320
    %v476 = vpop.f32.mrf.mxu0
    %v477 = vadd.f32 0.0, %v476
    %v478 = vpop.f32.mrf.mxu0
    %v479 = vpop.f32.mrf.mxu0
    %v480 = vadd.f32 0.0, %v479
    %v481 = vpop.f32.mrf.mxu0
    %482 = vdwg.mxu0
    %v483 = vld [vmem:[%s5] sm:$0xf]
    %v484 = vld [vmem:[%s5 + $0x4] sm:$0xf]
    %v485 = vld [vmem:[%s5 + $0x8] sm:$0xf]
    %v486 = vld [vmem:[%s5 + $0xc] sm:$0xf]
    %v487 = vld [vmem:[%s5 + $0x10] sm:$0xf]
    %v488 = vld [vmem:[%s5 + $0x14] sm:$0xf]
    %v495 = vunpack.c.l.b16 %v483
    %v496 = vunpack.c.l.b16 %v484
    %v497 = vunpack.c.l.b16 %v485
    %v498 = vunpack.c.l.b16 %v486
    %v499 = vunpack.c.l.b16 %v487
    %v500 = vunpack.c.l.b16 %v488
    %v501 = vpack.c.b16 %v496, %v495
    %v502 = vpack.c.b16 %v498, %v497
    %v503 = vpack.c.b16 %v500, %v499
    %507 = vmatprep.subr.bf16.mxu0 0
    %508 = vmatpush1.bf16.msra.mxu0 0
    %509 = vmatprep.subr.bf16.mxu0 0
    %510 = vmatpush1.bf16.msra.mxu0 0
    %511 = vmatprep.subr.bf16.mxu0 0
    %512 = vmatpush1.bf16.msra.mxu0 0
    %513 = vmatprep.subr.bf16.mxu0 0
    %514 = vmatpush1.bf16.msra.mxu0 0
    %515 = vmatprep.subr.bf16.mxu0 0
    %516 = vmatpush1.bf16.msra.mxu0 0
    %517 = vmatprep.subr.bf16.mxu0 0
    %518 = vmatpush1.bf16.msra.mxu0 %v503
    %519 = vmatprep.subr.bf16.mxu0 0
    %520 = vmatpush1.bf16.msra.mxu0 %v502
    %521 = vmatprep.subr.bf16.mxu0 0
    %522 = vmatpush1.bf16.msra.mxu0 %v501
    %523 = vmatprep.subr.bf16.mxu0 0
    %524 = vmatpush2.bf16.msra.mxu0 0
    %525 = vmatprep.subr.bf16.mxu0 0
    %526 = vmatpush2.bf16.msra.mxu0 0
    %527 = vmatprep.subr.bf16.mxu0 0
    %528 = vmatpush2.bf16.msra.mxu0 0
    %529 = vmatprep.subr.bf16.mxu0 0
    %530 = vmatpush2.bf16.msra.mxu0 0
    %531 = vmatprep.subr.bf16.mxu0 0
    %532 = vmatpush2.bf16.msra.mxu0 0
    %533 = vmatprep.subr.bf16.mxu0 0
    %534 = vmatpush2.bf16.msra.mxu0 0
    %535 = vmatprep.subr.bf16.mxu0 0
    %536 = vmatpush2.bf16.msra.mxu0 0
    %537 = vmatprep.subr.bf16.mxu0 0
    %538 = vmatpush2.bf16.msra.mxu0 0
    %539 = vmatprep.mubr.bf16.mxu0 0
    %540 = vmatmul.mubr.bf16.gmra.mxu0 %v275
    %v541 = vpop.f32.mrf.mxu0
    %v542 = vadd.f32 0.0, %v541
    %v543 = vpop.f32.mrf.mxu0
    %v544 = vpop.f32.mrf.mxu0
    %v545 = vadd.f32 0.0, %v544
    %v546 = vpop.f32.mrf.mxu0
    %547 = vmatprep.mubr.bf16.mxu0 0
    %548 = vmatmul.mubr.bf16.gmra.mxu0 %v278
    %v549 = vpop.f32.mrf.mxu0
    %v550 = vadd.f32 0.0, %v549
    %v551 = vpop.f32.mrf.mxu0
    %v552 = vpop.f32.mrf.mxu0
    %v553 = vadd.f32 0.0, %v552
    %v554 = vpop.f32.mrf.mxu0
    %555 = vmatprep.mubr.bf16.mxu0 0
    %556 = vmatmul.mubr.bf16.gmra.mxu0 %v281
    %v557 = vpop.f32.mrf.mxu0
    %v558 = vadd.f32 0.0, %v557
    %v559 = vpop.f32.mrf.mxu0
    %v560 = vpop.f32.mrf.mxu0
    %v561 = vadd.f32 0.0, %v560
    %v562 = vpop.f32.mrf.mxu0
    %563 = vmatprep.mubr.bf16.mxu0 0
    %564 = vmatmul.mubr.bf16.gmra.mxu0 %v284
    %v565 = vpop.f32.mrf.mxu0
    %v566 = vadd.f32 0.0, %v565
    %v567 = vpop.f32.mrf.mxu0
    %v568 = vpop.f32.mrf.mxu0
    %v569 = vadd.f32 0.0, %v568
    %v570 = vpop.f32.mrf.mxu0
    %571 = vmatprep.mubr.bf16.mxu0 0
    %572 = vmatmul.mubr.bf16.gmra.mxu0 %v287
    %v573 = vpop.f32.mrf.mxu0
    %v574 = vadd.f32 0.0, %v573
    %v575 = vpop.f32.mrf.mxu0
    %v576 = vpop.f32.mrf.mxu0
    %v577 = vadd.f32 0.0, %v576
    %v578 = vpop.f32.mrf.mxu0
    %579 = vmatprep.mubr.bf16.mxu0 0
    %580 = vmatmul.mubr.bf16.gmra.mxu0 %v290
    %v581 = vpop.f32.mrf.mxu0
    %v582 = vadd.f32 0.0, %v581
    %v583 = vpop.f32.mrf.mxu0
    %v584 = vpop.f32.mrf.mxu0
    %v585 = vadd.f32 0.0, %v584
    %v586 = vpop.f32.mrf.mxu0
    %587 = vmatprep.mubr.bf16.mxu0 0
    %588 = vmatmul.mubr.bf16.gmra.mxu0 %v293
    %v589 = vpop.f32.mrf.mxu0
    %v590 = vadd.f32 0.0, %v589
    %v591 = vpop.f32.mrf.mxu0
    %v592 = vpop.f32.mrf.mxu0
    %v593 = vadd.f32 0.0, %v592
    %v594 = vpop.f32.mrf.mxu0
    %595 = vmatprep.mubr.bf16.mxu0 0
    %596 = vmatmul.mubr.bf16.gmra.mxu0 %v296
    %v597 = vpop.f32.mrf.mxu0
    %v598 = vadd.f32 0.0, %v597
    %v599 = vpop.f32.mrf.mxu0
    %v600 = vpop.f32.mrf.mxu0
    %v601 = vadd.f32 0.0, %v600
    %v602 = vpop.f32.mrf.mxu0
    %603 = vmatprep.mubr.bf16.mxu0 0
    %604 = vmatmul.mubr.bf16.gmra.mxu0 %v299
    %v605 = vpop.f32.mrf.mxu0
    %v606 = vadd.f32 0.0, %v605
    %v607 = vpop.f32.mrf.mxu0
    %v608 = vpop.f32.mrf.mxu0
    %v609 = vadd.f32 0.0, %v608
    %v610 = vpop.f32.mrf.mxu0
    %611 = vmatprep.mubr.bf16.mxu0 0
    %612 = vmatmul.mubr.bf16.gmra.mxu0 %v302
    %v613 = vpop.f32.mrf.mxu0
    %v614 = vadd.f32 0.0, %v613
    %v615 = vpop.f32.mrf.mxu0
    %v616 = vpop.f32.mrf.mxu0
    %v617 = vadd.f32 0.0, %v616
    %v618 = vpop.f32.mrf.mxu0
    %619 = vmatprep.mubr.bf16.mxu0 0
    %620 = vmatmul.mubr.bf16.gmra.mxu0 %v305
    %v621 = vpop.f32.mrf.mxu0
    %v622 = vadd.f32 0.0, %v621
    %v623 = vpop.f32.mrf.mxu0
    %v624 = vpop.f32.mrf.mxu0
    %v625 = vadd.f32 0.0, %v624
    %v626 = vpop.f32.mrf.mxu0
    %627 = vmatprep.mubr.bf16.mxu0 0
    %628 = vmatmul.mubr.bf16.gmra.mxu0 %v308
    %v629 = vpop.f32.mrf.mxu0
    %v630 = vadd.f32 0.0, %v629
    %v631 = vpop.f32.mrf.mxu0
    %v632 = vpop.f32.mrf.mxu0
    %v633 = vadd.f32 0.0, %v632
    %v634 = vpop.f32.mrf.mxu0
    %635 = vmatprep.mubr.bf16.mxu0 0
    %636 = vmatmul.mubr.bf16.gmra.mxu0 %v311
    %v637 = vpop.f32.mrf.mxu0
    %v638 = vadd.f32 0.0, %v637
    %v639 = vpop.f32.mrf.mxu0
    %v640 = vpop.f32.mrf.mxu0
    %v641 = vadd.f32 0.0, %v640
    %v642 = vpop.f32.mrf.mxu0
    %643 = vmatprep.mubr.bf16.mxu0 0
    %644 = vmatmul.mubr.bf16.gmra.mxu0 %v314
    %v645 = vpop.f32.mrf.mxu0
    %v646 = vadd.f32 0.0, %v645
    %v647 = vpop.f32.mrf.mxu0
    %v648 = vpop.f32.mrf.mxu0
    %v649 = vadd.f32 0.0, %v648
    %v650 = vpop.f32.mrf.mxu0
    %651 = vmatprep.mubr.bf16.mxu0 0
    %652 = vmatmul.mubr.bf16.gmra.mxu0 %v317
    %v653 = vpop.f32.mrf.mxu0
    %v654 = vadd.f32 0.0, %v653
    %v655 = vpop.f32.mrf.mxu0
    %v656 = vpop.f32.mrf.mxu0
    %v657 = vadd.f32 0.0, %v656
    %v658 = vpop.f32.mrf.mxu0
    %659 = vmatprep.mubr.bf16.mxu0 0
    %660 = vmatmul.mubr.bf16.gmra.mxu0 %v320
    %v661 = vpop.f32.mrf.mxu0
    %v662 = vadd.f32 0.0, %v661
    %v663 = vpop.f32.mrf.mxu0
    %v664 = vpop.f32.mrf.mxu0
    %v665 = vadd.f32 0.0, %v664
    %v666 = vpop.f32.mrf.mxu0
    %667 = vdwg.mxu0
    %v672 = vcombine.high %v155, %v155
    %v674 = vunpack.c.l.s4 1966171168
    %v675 = vunpack.c.0.s8 %v674
    %v676 = vlaneseq
    %v677 = vshrl.u32 %v676, 7
    %v678 = vsub.s32 %v675, %v677
    %v679 = vrot.slane %v155, %v678
    %v681 = vunpack.c.l.s4 1966171168
    %v682 = vunpack.c.0.s8 %v681
    %v683 = vlaneseq
    %v684 = vshrl.u32 %v683, 7
    %v685 = vsub.s32 %v682, %v684
    %v686 = vrot.slane %v672, %v685
    %v687 = vcombine.high %v679, %v679
    %v688 = vcombine.high %v686, %v686
    %v690 = vunpack.c.l.s4 1966171168
    %v691 = vunpack.c.0.s8 %v690
    %v692 = vlaneseq
    %v693 = vshrl.u32 %v692, 7
    %v694 = vsub.s32 %v691, %v693
    %v695 = vrot.slane %v679, %v694
    %v697 = vunpack.c.l.s4 1966171168
    %v698 = vunpack.c.0.s8 %v697
    %v699 = vlaneseq
    %v700 = vshrl.u32 %v699, 7
    %v701 = vsub.s32 %v698, %v700
    %v702 = vrot.slane %v686, %v701
    %v704 = vunpack.c.l.s4 1966171168
    %v705 = vunpack.c.0.s8 %v704
    %v706 = vlaneseq
    %v707 = vshrl.u32 %v706, 7
    %v708 = vsub.s32 %v705, %v707
    %v709 = vrot.slane %v687, %v708
    %v711 = vunpack.c.l.s4 1966171168
    %v712 = vunpack.c.0.s8 %v711
    %v713 = vlaneseq
    %v714 = vshrl.u32 %v713, 7
    %v715 = vsub.s32 %v712, %v714
    %v716 = vrot.slane %v688, %v715
    %v717 = vcombine.high %v695, %v695
    %v718 = vcombine.high %v702, %v702
    %v719 = vcombine.high %v709, %v709
    %v720 = vcombine.high %v716, %v716
    %v721 = vcombine.high %v158, %v158
    %v723 = vunpack.c.l.s4 1966171168
    %v724 = vunpack.c.0.s8 %v723
    %v725 = vlaneseq
    %v726 = vshrl.u32 %v725, 7
    %v727 = vsub.s32 %v724, %v726
    %v728 = vrot.slane %v158, %v727
    %v730 = vunpack.c.l.s4 1966171168
    %v731 = vunpack.c.0.s8 %v730
    %v732 = vlaneseq
    %v733 = vshrl.u32 %v732, 7
    %v734 = vsub.s32 %v731, %v733
    %v735 = vrot.slane %v721, %v734
    %v736 = vcombine.high %v728, %v728
    %v737 = vcombine.high %v735, %v735
    %v739 = vunpack.c.l.s4 1966171168
    %v740 = vunpack.c.0.s8 %v739
    %v741 = vlaneseq
    %v742 = vshrl.u32 %v741, 7
    %v743 = vsub.s32 %v740, %v742
    %v744 = vrot.slane %v728, %v743
    %v746 = vunpack.c.l.s4 1966171168
    %v747 = vunpack.c.0.s8 %v746
    %v748 = vlaneseq
    %v749 = vshrl.u32 %v748, 7
    %v750 = vsub.s32 %v747, %v749
    %v751 = vrot.slane %v735, %v750
    %v753 = vunpack.c.l.s4 1966171168
    %v754 = vunpack.c.0.s8 %v753
    %v755 = vlaneseq
    %v756 = vshrl.u32 %v755, 7
    %v757 = vsub.s32 %v754, %v756
    %v758 = vrot.slane %v736, %v757
    %v760 = vunpack.c.l.s4 1966171168
    %v761 = vunpack.c.0.s8 %v760
    %v762 = vlaneseq
    %v763 = vshrl.u32 %v762, 7
    %v764 = vsub.s32 %v761, %v763
    %v765 = vrot.slane %v737, %v764
    %v766 = vcombine.high %v744, %v744
    %v767 = vcombine.high %v751, %v751
    %v768 = vcombine.high %v758, %v758
    %v769 = vcombine.high %v765, %v765
    %v770 = vcombine.high %v163, %v163
    %v772 = vunpack.c.l.s4 1966171168
    %v773 = vunpack.c.0.s8 %v772
    %v774 = vlaneseq
    %v775 = vshrl.u32 %v774, 7
    %v776 = vsub.s32 %v773, %v775
    %v777 = vrot.slane %v163, %v776
    %v779 = vunpack.c.l.s4 1966171168
    %v780 = vunpack.c.0.s8 %v779
    %v781 = vlaneseq
    %v782 = vshrl.u32 %v781, 7
    %v783 = vsub.s32 %v780, %v782
    %v784 = vrot.slane %v770, %v783
    %v785 = vcombine.high %v777, %v777
    %v786 = vcombine.high %v784, %v784
    %v788 = vunpack.c.l.s4 1966171168
    %v789 = vunpack.c.0.s8 %v788
    %v790 = vlaneseq
    %v791 = vshrl.u32 %v790, 7
    %v792 = vsub.s32 %v789, %v791
    %v793 = vrot.slane %v777, %v792
    %v795 = vunpack.c.l.s4 1966171168
    %v796 = vunpack.c.0.s8 %v795
    %v797 = vlaneseq
    %v798 = vshrl.u32 %v797, 7
    %v799 = vsub.s32 %v796, %v798
    %v800 = vrot.slane %v784, %v799
    %v802 = vunpack.c.l.s4 1966171168
    %v803 = vunpack.c.0.s8 %v802
    %v804 = vlaneseq
    %v805 = vshrl.u32 %v804, 7
    %v806 = vsub.s32 %v803, %v805
    %v807 = vrot.slane %v785, %v806
    %v809 = vunpack.c.l.s4 1966171168
    %v810 = vunpack.c.0.s8 %v809
    %v811 = vlaneseq
    %v812 = vshrl.u32 %v811, 7
    %v813 = vsub.s32 %v810, %v812
    %v814 = vrot.slane %v786, %v813
    %v815 = vcombine.high %v793, %v793
    %v816 = vcombine.high %v800, %v800
    %v817 = vcombine.high %v807, %v807
    %v818 = vcombine.high %v814, %v814
    %v819 = vcombine.high %v166, %v166
    %v821 = vunpack.c.l.s4 1966171168
    %v822 = vunpack.c.0.s8 %v821
    %v823 = vlaneseq
    %v824 = vshrl.u32 %v823, 7
    %v825 = vsub.s32 %v822, %v824
    %v826 = vrot.slane %v166, %v825
    %v828 = vunpack.c.l.s4 1966171168
    %v829 = vunpack.c.0.s8 %v828
    %v830 = vlaneseq
    %v831 = vshrl.u32 %v830, 7
    %v832 = vsub.s32 %v829, %v831
    %v833 = vrot.slane %v819, %v832
    %v834 = vcombine.high %v826, %v826
    %v835 = vcombine.high %v833, %v833
    %v837 = vunpack.c.l.s4 1966171168
    %v838 = vunpack.c.0.s8 %v837
    %v839 = vlaneseq
    %v840 = vshrl.u32 %v839, 7
    %v841 = vsub.s32 %v838, %v840
    %v842 = vrot.slane %v826, %v841
    %v844 = vunpack.c.l.s4 1966171168
    %v845 = vunpack.c.0.s8 %v844
    %v846 = vlaneseq
    %v847 = vshrl.u32 %v846, 7
    %v848 = vsub.s32 %v845, %v847
    %v849 = vrot.slane %v833, %v848
    %v851 = vunpack.c.l.s4 1966171168
    %v852 = vunpack.c.0.s8 %v851
    %v853 = vlaneseq
    %v854 = vshrl.u32 %v853, 7
    %v855 = vsub.s32 %v852, %v854
    %v856 = vrot.slane %v834, %v855
    %v858 = vunpack.c.l.s4 1966171168
    %v859 = vunpack.c.0.s8 %v858
    %v860 = vlaneseq
    %v861 = vshrl.u32 %v860, 7
    %v862 = vsub.s32 %v859, %v861
    %v863 = vrot.slane %v835, %v862
    %v864 = vcombine.high %v842, %v842
    %v865 = vcombine.high %v849, %v849
    %v866 = vcombine.high %v856, %v856
    %v867 = vcombine.high %v863, %v863
    %v868 = vlaneseq
    %v869 = vshrl.u32 %v868, 7
    %v870 = vsub.s32 0, %v869
    %v871 = vrot.slane %v695, %v870
    %v872 = vlaneseq
    %v873 = vshrl.u32 %v872, 7
    %v874 = vsub.s32 0, %v873
    %v875 = vrot.slane %v709, %v874
    %v876 = vlaneseq
    %v877 = vshrl.u32 %v876, 7
    %v878 = vsub.s32 0, %v877
    %v879 = vrot.slane %v717, %v878
    %v880 = vlaneseq
    %v881 = vshrl.u32 %v880, 7
    %v882 = vsub.s32 0, %v881
    %v883 = vrot.slane %v719, %v882
    %v884 = vlaneseq
    %v885 = vshrl.u32 %v884, 7
    %v886 = vsub.s32 0, %v885
    %v887 = vrot.slane %v702, %v886
    %v888 = vlaneseq
    %v889 = vshrl.u32 %v888, 7
    %v890 = vsub.s32 0, %v889
    %v891 = vrot.slane %v716, %v890
    %v892 = vlaneseq
    %v893 = vshrl.u32 %v892, 7
    %v894 = vsub.s32 0, %v893
    %v895 = vrot.slane %v718, %v894
    %v896 = vlaneseq
    %v897 = vshrl.u32 %v896, 7
    %v898 = vsub.s32 0, %v897
    %v899 = vrot.slane %v720, %v898
    %v900 = vlaneseq
    %v901 = vshrl.u32 %v900, 7
    %v902 = vsub.s32 0, %v901
    %v903 = vrot.slane %v744, %v902
    %v904 = vlaneseq
    %v905 = vshrl.u32 %v904, 7
    %v906 = vsub.s32 0, %v905
    %v907 = vrot.slane %v758, %v906
    %v908 = vlaneseq
    %v909 = vshrl.u32 %v908, 7
    %v910 = vsub.s32 0, %v909
    %v911 = vrot.slane %v766, %v910
    %v912 = vlaneseq
    %v913 = vshrl.u32 %v912, 7
    %v914 = vsub.s32 0, %v913
    %v915 = vrot.slane %v768, %v914
    %v916 = vlaneseq
    %v917 = vshrl.u32 %v916, 7
    %v918 = vsub.s32 0, %v917
    %v919 = vrot.slane %v751, %v918
    %v920 = vlaneseq
    %v921 = vshrl.u32 %v920, 7
    %v922 = vsub.s32 0, %v921
    %v923 = vrot.slane %v765, %v922
    %v924 = vlaneseq
    %v925 = vshrl.u32 %v924, 7
    %v926 = vsub.s32 0, %v925
    %v927 = vrot.slane %v767, %v926
    %v928 = vlaneseq
    %v929 = vshrl.u32 %v928, 7
    %v930 = vsub.s32 0, %v929
    %v931 = vrot.slane %v769, %v930
    %v932 = vlaneseq
    %v933 = vshrl.u32 %v932, 7
    %v934 = vsub.s32 0, %v933
    %v935 = vrot.slane %v793, %v934
    %v936 = vlaneseq
    %v937 = vshrl.u32 %v936, 7
    %v938 = vsub.s32 0, %v937
    %v939 = vrot.slane %v807, %v938
    %v940 = vlaneseq
    %v941 = vshrl.u32 %v940, 7
    %v942 = vsub.s32 0, %v941
    %v943 = vrot.slane %v815, %v942
    %v944 = vlaneseq
    %v945 = vshrl.u32 %v944, 7
    %v946 = vsub.s32 0, %v945
    %v947 = vrot.slane %v817, %v946
    %v948 = vlaneseq
    %v949 = vshrl.u32 %v948, 7
    %v950 = vsub.s32 0, %v949
    %v951 = vrot.slane %v800, %v950
    %v952 = vlaneseq
    %v953 = vshrl.u32 %v952, 7
    %v954 = vsub.s32 0, %v953
    %v955 = vrot.slane %v814, %v954
    %v956 = vlaneseq
    %v957 = vshrl.u32 %v956, 7
    %v958 = vsub.s32 0, %v957
    %v959 = vrot.slane %v816, %v958
    %v960 = vlaneseq
    %v961 = vshrl.u32 %v960, 7
    %v962 = vsub.s32 0, %v961
    %v963 = vrot.slane %v818, %v962
    %v964 = vlaneseq
    %v965 = vshrl.u32 %v964, 7
    %v966 = vsub.s32 0, %v965
    %v967 = vrot.slane %v842, %v966
    %v968 = vlaneseq
    %v969 = vshrl.u32 %v968, 7
    %v970 = vsub.s32 0, %v969
    %v971 = vrot.slane %v856, %v970
    %v972 = vlaneseq
    %v973 = vshrl.u32 %v972, 7
    %v974 = vsub.s32 0, %v973
    %v975 = vrot.slane %v864, %v974
    %v976 = vlaneseq
    %v977 = vshrl.u32 %v976, 7
    %v978 = vsub.s32 0, %v977
    %v979 = vrot.slane %v866, %v978
    %v980 = vlaneseq
    %v981 = vshrl.u32 %v980, 7
    %v982 = vsub.s32 0, %v981
    %v983 = vrot.slane %v849, %v982
    %v984 = vlaneseq
    %v985 = vshrl.u32 %v984, 7
    %v986 = vsub.s32 0, %v985
    %v987 = vrot.slane %v863, %v986
    %v988 = vlaneseq
    %v989 = vshrl.u32 %v988, 7
    %v990 = vsub.s32 0, %v989
    %v991 = vrot.slane %v865, %v990
    %v992 = vlaneseq
    %v993 = vshrl.u32 %v992, 7
    %v994 = vsub.s32 0, %v993
    %v995 = vrot.slane %v867, %v994
    %v1028 = vmul.f32 %v871, %v357
    %v1029 = vmul.f32 %v875, %v360
    %v1030 = vmul.f32 %v879, %v365
    %v1031 = vmul.f32 %v883, %v368
    %v1032 = vmul.f32 %v887, %v373
    %v1033 = vmul.f32 %v891, %v376
    %v1034 = vmul.f32 %v895, %v381
    %v1035 = vmul.f32 %v899, %v384
    %v1036 = vmul.f32 %v903, %v389
    %v1037 = vmul.f32 %v907, %v392
    %v1038 = vmul.f32 %v911, %v397
    %v1039 = vmul.f32 %v915, %v400
    %v1040 = vmul.f32 %v919, %v405
    %v1041 = vmul.f32 %v923, %v408
    %v1042 = vmul.f32 %v927, %v413
    %v1043 = vmul.f32 %v931, %v416
    %v1044 = vmul.f32 %v935, %v421
    %v1045 = vmul.f32 %v939, %v424
    %v1046 = vmul.f32 %v943, %v429
    %v1047 = vmul.f32 %v947, %v432
    %v1048 = vmul.f32 %v951, %v437
    %v1049 = vmul.f32 %v955, %v440
    %v1050 = vmul.f32 %v959, %v445
    %v1051 = vmul.f32 %v963, %v448
    %v1052 = vmul.f32 %v967, %v453
    %v1053 = vmul.f32 %v971, %v456
    %v1054 = vmul.f32 %v975, %v461
    %v1055 = vmul.f32 %v979, %v464
    %v1056 = vmul.f32 %v983, %v469
    %v1057 = vmul.f32 %v987, %v472
    %v1058 = vmul.f32 %v991, %v477
    %v1059 = vmul.f32 %v995, %v480
    %v1060 = vpack.c.bf16 %v1029, %v1028
    %v1061 = vpack.c.bf16 %v1031, %v1030
    %v1062 = vpack.c.bf16 %v1033, %v1032
    %v1063 = vpack.c.bf16 %v1035, %v1034
    %v1064 = vpack.c.bf16 %v1037, %v1036
    %v1065 = vpack.c.bf16 %v1039, %v1038
    %v1066 = vpack.c.bf16 %v1041, %v1040
    %v1067 = vpack.c.bf16 %v1043, %v1042
    %v1068 = vpack.c.bf16 %v1045, %v1044
    %v1069 = vpack.c.bf16 %v1047, %v1046
    %v1070 = vpack.c.bf16 %v1049, %v1048
    %v1071 = vpack.c.bf16 %v1051, %v1050
    %v1072 = vpack.c.bf16 %v1053, %v1052
    %v1073 = vpack.c.bf16 %v1055, %v1054
    %v1074 = vpack.c.bf16 %v1057, %v1056
    %v1075 = vpack.c.bf16 %v1059, %v1058
    %v1076 = vld [vmem:[%s7] sm:$0xf]
    %v1077 = vld [vmem:[%s7 + $0x4] sm:$0xf]
    %v1078 = vld [vmem:[%s7 + $0x8] sm:$0xf]
    %v1079 = vld [vmem:[%s7 + $0xc] sm:$0xf]
    %v1084 = vunpack.c.l.b16 %v1076
    %v1085 = vunpack.c.l.b16 %v1077
    %v1086 = vunpack.c.l.b16 %v1078
    %v1087 = vunpack.c.l.b16 %v1079
    %v1088 = vpack.c.b16 %v1085, %v1084
    %v1089 = vpack.c.b16 %v1087, %v1086
    %v1093 = vsel %vm113, %v1060, 0
    %v1096 = vsel %vm113, %v1061, 0
    %v1099 = vsel %vm113, %v1062, 0
    %v1102 = vsel %vm113, %v1063, 0
    %v1105 = vsel %vm113, %v1064, 0
    %v1108 = vsel %vm113, %v1065, 0
    %v1111 = vsel %vm113, %v1066, 0
    %v1114 = vsel %vm113, %v1067, 0
    %v1117 = vsel %vm113, %v1068, 0
    %v1120 = vsel %vm113, %v1069, 0
    %v1123 = vsel %vm113, %v1070, 0
    %v1126 = vsel %vm113, %v1071, 0
    %v1129 = vsel %vm113, %v1072, 0
    %v1132 = vsel %vm113, %v1073, 0
    %v1135 = vsel %vm113, %v1074, 0
    %v1138 = vsel %vm113, %v1075, 0
    %1140 = vmatprep.subr.bf16.mxu0 0
    %1141 = vmatpush1.bf16.msra.mxu0 0
    %1142 = vmatprep.subr.bf16.mxu0 0
    %1143 = vmatpush1.bf16.msra.mxu0 0
    %1144 = vmatprep.subr.bf16.mxu0 0
    %1145 = vmatpush1.bf16.msra.mxu0 0
    %1146 = vmatprep.subr.bf16.mxu0 0
    %1147 = vmatpush1.bf16.msra.mxu0 0
    %1148 = vmatprep.subr.bf16.mxu0 0
    %1149 = vmatpush1.bf16.msra.mxu0 0
    %1150 = vmatprep.subr.bf16.mxu0 0
    %1151 = vmatpush1.bf16.msra.mxu0 0
    %1152 = vmatprep.subr.bf16.mxu0 0
    %1153 = vmatpush1.bf16.msra.mxu0 %v1089
    %1154 = vmatprep.subr.bf16.mxu0 0
    %1155 = vmatpush1.bf16.msra.mxu0 %v1088
    %1156 = vmatprep.subr.bf16.mxu0 0
    %1157 = vmatpush2.bf16.msra.mxu0 0
    %1158 = vmatprep.subr.bf16.mxu0 0
    %1159 = vmatpush2.bf16.msra.mxu0 0
    %1160 = vmatprep.subr.bf16.mxu0 0
    %1161 = vmatpush2.bf16.msra.mxu0 0
    %1162 = vmatprep.subr.bf16.mxu0 0
    %1163 = vmatpush2.bf16.msra.mxu0 0
    %1164 = vmatprep.subr.bf16.mxu0 0
    %1165 = vmatpush2.bf16.msra.mxu0 0
    %1166 = vmatprep.subr.bf16.mxu0 0
    %1167 = vmatpush2.bf16.msra.mxu0 0
    %1168 = vmatprep.subr.bf16.mxu0 0
    %1169 = vmatpush2.bf16.msra.mxu0 0
    %1170 = vmatprep.subr.bf16.mxu0 0
    %1171 = vmatpush2.bf16.msra.mxu0 0
    %1172 = vmatprep.mubr.bf16.mxu0 0
    %1173 = vmatmul.mubr.bf16.gmra.mxu0 %v1093
    %v1174 = vpop.f32.mrf.mxu0
    %v1175 = vadd.f32 0.0, %v1174
    %v1176 = vpop.f32.mrf.mxu0
    %v1177 = vpop.f32.mrf.mxu0
    %v1178 = vadd.f32 0.0, %v1177
    %v1179 = vpop.f32.mrf.mxu0
    %1180 = vmatprep.mubr.bf16.mxu0 0
    %1181 = vmatmul.mubr.bf16.gmra.mxu0 %v1096
    %v1182 = vpop.f32.mrf.mxu0
    %v1183 = vadd.f32 0.0, %v1182
    %v1184 = vpop.f32.mrf.mxu0
    %v1185 = vpop.f32.mrf.mxu0
    %v1186 = vadd.f32 0.0, %v1185
    %v1187 = vpop.f32.mrf.mxu0
    %1188 = vmatprep.mubr.bf16.mxu0 0
    %1189 = vmatmul.mubr.bf16.gmra.mxu0 %v1099
    %v1190 = vpop.f32.mrf.mxu0
    %v1191 = vadd.f32 0.0, %v1190
    %v1192 = vpop.f32.mrf.mxu0
    %v1193 = vpop.f32.mrf.mxu0
    %v1194 = vadd.f32 0.0, %v1193
    %v1195 = vpop.f32.mrf.mxu0
    %1196 = vmatprep.mubr.bf16.mxu0 0
    %1197 = vmatmul.mubr.bf16.gmra.mxu0 %v1102
    %v1198 = vpop.f32.mrf.mxu0
    %v1199 = vadd.f32 0.0, %v1198
    %v1200 = vpop.f32.mrf.mxu0
    %v1201 = vpop.f32.mrf.mxu0
    %v1202 = vadd.f32 0.0, %v1201
    %v1203 = vpop.f32.mrf.mxu0
    %1204 = vmatprep.mubr.bf16.mxu0 0
    %1205 = vmatmul.mubr.bf16.gmra.mxu0 %v1105
    %v1206 = vpop.f32.mrf.mxu0
    %v1207 = vadd.f32 0.0, %v1206
    %v1208 = vpop.f32.mrf.mxu0
    %v1209 = vpop.f32.mrf.mxu0
    %v1210 = vadd.f32 0.0, %v1209
    %v1211 = vpop.f32.mrf.mxu0
    %1212 = vmatprep.mubr.bf16.mxu0 0
    %1213 = vmatmul.mubr.bf16.gmra.mxu0 %v1108
    %v1214 = vpop.f32.mrf.mxu0
    %v1215 = vadd.f32 0.0, %v1214
    %v1216 = vpop.f32.mrf.mxu0
    %v1217 = vpop.f32.mrf.mxu0
    %v1218 = vadd.f32 0.0, %v1217
    %v1219 = vpop.f32.mrf.mxu0
    %1220 = vmatprep.mubr.bf16.mxu0 0
    %1221 = vmatmul.mubr.bf16.gmra.mxu0 %v1111
    %v1222 = vpop.f32.mrf.mxu0
    %v1223 = vadd.f32 0.0, %v1222
    %v1224 = vpop.f32.mrf.mxu0
    %v1225 = vpop.f32.mrf.mxu0
    %v1226 = vadd.f32 0.0, %v1225
    %v1227 = vpop.f32.mrf.mxu0
    %1228 = vmatprep.mubr.bf16.mxu0 0
    %1229 = vmatmul.mubr.bf16.gmra.mxu0 %v1114
    %v1230 = vpop.f32.mrf.mxu0
    %v1231 = vadd.f32 0.0, %v1230
    %v1232 = vpop.f32.mrf.mxu0
    %v1233 = vpop.f32.mrf.mxu0
    %v1234 = vadd.f32 0.0, %v1233
    %v1235 = vpop.f32.mrf.mxu0
    %1236 = vmatprep.mubr.bf16.mxu0 0
    %1237 = vmatmul.mubr.bf16.gmra.mxu0 %v1117
    %v1238 = vpop.f32.mrf.mxu0
    %v1239 = vadd.f32 0.0, %v1238
    %v1240 = vpop.f32.mrf.mxu0
    %v1241 = vpop.f32.mrf.mxu0
    %v1242 = vadd.f32 0.0, %v1241
    %v1243 = vpop.f32.mrf.mxu0
    %1244 = vmatprep.mubr.bf16.mxu0 0
    %1245 = vmatmul.mubr.bf16.gmra.mxu0 %v1120
    %v1246 = vpop.f32.mrf.mxu0
    %v1247 = vadd.f32 0.0, %v1246
    %v1248 = vpop.f32.mrf.mxu0
    %v1249 = vpop.f32.mrf.mxu0
    %v1250 = vadd.f32 0.0, %v1249
    %v1251 = vpop.f32.mrf.mxu0
    %1252 = vmatprep.mubr.bf16.mxu0 0
    %1253 = vmatmul.mubr.bf16.gmra.mxu0 %v1123
    %v1254 = vpop.f32.mrf.mxu0
    %v1255 = vadd.f32 0.0, %v1254
    %v1256 = vpop.f32.mrf.mxu0
    %v1257 = vpop.f32.mrf.mxu0
    %v1258 = vadd.f32 0.0, %v1257
    %v1259 = vpop.f32.mrf.mxu0
    %1260 = vmatprep.mubr.bf16.mxu0 0
    %1261 = vmatmul.mubr.bf16.gmra.mxu0 %v1126
    %v1262 = vpop.f32.mrf.mxu0
    %v1263 = vadd.f32 0.0, %v1262
    %v1264 = vpop.f32.mrf.mxu0
    %v1265 = vpop.f32.mrf.mxu0
    %v1266 = vadd.f32 0.0, %v1265
    %v1267 = vpop.f32.mrf.mxu0
    %1268 = vmatprep.mubr.bf16.mxu0 0
    %1269 = vmatmul.mubr.bf16.gmra.mxu0 %v1129
    %v1270 = vpop.f32.mrf.mxu0
    %v1271 = vadd.f32 0.0, %v1270
    %v1272 = vpop.f32.mrf.mxu0
    %v1273 = vpop.f32.mrf.mxu0
    %v1274 = vadd.f32 0.0, %v1273
    %v1275 = vpop.f32.mrf.mxu0
    %1276 = vmatprep.mubr.bf16.mxu0 0
    %1277 = vmatmul.mubr.bf16.gmra.mxu0 %v1132
    %v1278 = vpop.f32.mrf.mxu0
    %v1279 = vadd.f32 0.0, %v1278
    %v1280 = vpop.f32.mrf.mxu0
    %v1281 = vpop.f32.mrf.mxu0
    %v1282 = vadd.f32 0.0, %v1281
    %v1283 = vpop.f32.mrf.mxu0
    %1284 = vmatprep.mubr.bf16.mxu0 0
    %1285 = vmatmul.mubr.bf16.gmra.mxu0 %v1135
    %v1286 = vpop.f32.mrf.mxu0
    %v1287 = vadd.f32 0.0, %v1286
    %v1288 = vpop.f32.mrf.mxu0
    %v1289 = vpop.f32.mrf.mxu0
    %v1290 = vadd.f32 0.0, %v1289
    %v1291 = vpop.f32.mrf.mxu0
    %1292 = vmatprep.mubr.bf16.mxu0 0
    %1293 = vmatmul.mubr.bf16.gmra.mxu0 %v1138
    %v1294 = vpop.f32.mrf.mxu0
    %v1295 = vadd.f32 0.0, %v1294
    %v1296 = vpop.f32.mrf.mxu0
    %v1297 = vpop.f32.mrf.mxu0
    %v1298 = vadd.f32 0.0, %v1297
    %v1299 = vpop.f32.mrf.mxu0
    %1300 = vdwg.mxu0
    %v1305 = vunpack.c.l.b16 %v83
    %v1306 = vunpack.c.l.b16 %v84
    %v1307 = vunpack.c.l.b16 %v85
    %v1308 = vunpack.c.l.b16 %v86
    %v1309 = vpack.c.b16 %v1306, %v1305
    %v1310 = vpack.c.b16 %v1308, %v1307
    %v1312 = vpack.i.b16 %v1309, %v1309
    %v1314 = vlaneseq
    %v1315 = vshrl.u32 %v1314, 7
    %v1316 = vsub.s32 0, %v1315
    %v1317 = vrot.slane %v1312, %v1316
    %1319 = vbcast.lane.c.b16.xlu0 %v1317, 256
    %v1320 = vpop.permute.xlu0 %1319
    %v1321 = vshrl.u32 %v1309, 16
    %v1322 = vpack.i.b16 %v1321, %v1321
    %v1324 = vlaneseq
    %v1325 = vshrl.u32 %v1324, 7
    %v1326 = vsub.s32 0, %v1325
    %v1327 = vrot.slane %v1322, %v1326
    %1329 = vbcast.lane.c.b16.xlu0 %v1327, 256
    %v1330 = vpop.permute.xlu0 %1329
    %v1331 = vlaneseq
    %v1332 = vshrl.u32 %v1331, 7
    %v1333 = vsub.s32 1, %v1332
    %v1334 = vrot.slane %v1312, %v1333
    %1336 = vbcast.lane.c.b16.xlu0 %v1334, 256
    %v1337 = vpop.permute.xlu0 %1336
    %v1338 = vlaneseq
    %v1339 = vshrl.u32 %v1338, 7
    %v1340 = vsub.s32 1, %v1339
    %v1341 = vrot.slane %v1322, %v1340
    %1343 = vbcast.lane.c.b16.xlu0 %v1341, 256
    %v1344 = vpop.permute.xlu0 %1343
    %v1345 = vlaneseq
    %v1346 = vshrl.u32 %v1345, 7
    %v1347 = vsub.s32 2, %v1346
    %v1348 = vrot.slane %v1312, %v1347
    %1350 = vbcast.lane.c.b16.xlu0 %v1348, 256
    %v1351 = vpop.permute.xlu0 %1350
    %v1352 = vlaneseq
    %v1353 = vshrl.u32 %v1352, 7
    %v1354 = vsub.s32 2, %v1353
    %v1355 = vrot.slane %v1322, %v1354
    %1357 = vbcast.lane.c.b16.xlu0 %v1355, 256
    %v1358 = vpop.permute.xlu0 %1357
    %v1359 = vlaneseq
    %v1360 = vshrl.u32 %v1359, 7
    %v1361 = vsub.s32 3, %v1360
    %v1362 = vrot.slane %v1312, %v1361
    %1364 = vbcast.lane.c.b16.xlu0 %v1362, 256
    %v1365 = vpop.permute.xlu0 %1364
    %v1366 = vlaneseq
    %v1367 = vshrl.u32 %v1366, 7
    %v1368 = vsub.s32 3, %v1367
    %v1369 = vrot.slane %v1322, %v1368
    %1371 = vbcast.lane.c.b16.xlu0 %v1369, 256
    %v1372 = vpop.permute.xlu0 %1371
    %v1373 = vlaneseq
    %v1374 = vshrl.u32 %v1373, 7
    %v1375 = vsub.s32 4, %v1374
    %v1376 = vrot.slane %v1312, %v1375
    %1378 = vbcast.lane.c.b16.xlu0 %v1376, 256
    %v1379 = vpop.permute.xlu0 %1378
    %v1380 = vlaneseq
    %v1381 = vshrl.u32 %v1380, 7
    %v1382 = vsub.s32 4, %v1381
    %v1383 = vrot.slane %v1322, %v1382
    %1385 = vbcast.lane.c.b16.xlu0 %v1383, 256
    %v1386 = vpop.permute.xlu0 %1385
    %v1387 = vlaneseq
    %v1388 = vshrl.u32 %v1387, 7
    %v1389 = vsub.s32 5, %v1388
    %v1390 = vrot.slane %v1312, %v1389
    %1392 = vbcast.lane.c.b16.xlu0 %v1390, 256
    %v1393 = vpop.permute.xlu0 %1392
    %v1394 = vlaneseq
    %v1395 = vshrl.u32 %v1394, 7
    %v1396 = vsub.s32 5, %v1395
    %v1397 = vrot.slane %v1322, %v1396
    %1399 = vbcast.lane.c.b16.xlu0 %v1397, 256
    %v1400 = vpop.permute.xlu0 %1399
    %v1401 = vlaneseq
    %v1402 = vshrl.u32 %v1401, 7
    %v1403 = vsub.s32 6, %v1402
    %v1404 = vrot.slane %v1312, %v1403
    %1406 = vbcast.lane.c.b16.xlu0 %v1404, 256
    %v1407 = vpop.permute.xlu0 %1406
    %v1408 = vlaneseq
    %v1409 = vshrl.u32 %v1408, 7
    %v1410 = vsub.s32 6, %v1409
    %v1411 = vrot.slane %v1322, %v1410
    %1413 = vbcast.lane.c.b16.xlu0 %v1411, 256
    %v1414 = vpop.permute.xlu0 %1413
    %v1415 = vlaneseq
    %v1416 = vshrl.u32 %v1415, 7
    %v1417 = vsub.s32 7, %v1416
    %v1418 = vrot.slane %v1312, %v1417
    %1420 = vbcast.lane.c.b16.xlu0 %v1418, 256
    %v1421 = vpop.permute.xlu0 %1420
    %v1422 = vlaneseq
    %v1423 = vshrl.u32 %v1422, 7
    %v1424 = vsub.s32 7, %v1423
    %v1425 = vrot.slane %v1322, %v1424
    %1427 = vbcast.lane.c.b16.xlu0 %v1425, 256
    %v1428 = vpop.permute.xlu0 %1427
    %v1430 = vpack.i.b16 %v1310, %v1310
    %v1432 = vlaneseq
    %v1433 = vshrl.u32 %v1432, 7
    %v1434 = vsub.s32 0, %v1433
    %v1435 = vrot.slane %v1430, %v1434
    %1437 = vbcast.lane.c.b16.xlu0 %v1435, 256
    %v1438 = vpop.permute.xlu0 %1437
    %v1439 = vshrl.u32 %v1310, 16
    %v1440 = vpack.i.b16 %v1439, %v1439
    %v1442 = vlaneseq
    %v1443 = vshrl.u32 %v1442, 7
    %v1444 = vsub.s32 0, %v1443
    %v1445 = vrot.slane %v1440, %v1444
    %1447 = vbcast.lane.c.b16.xlu0 %v1445, 256
    %v1448 = vpop.permute.xlu0 %1447
    %v1449 = vlaneseq
    %v1450 = vshrl.u32 %v1449, 7
    %v1451 = vsub.s32 1, %v1450
    %v1452 = vrot.slane %v1430, %v1451
    %1454 = vbcast.lane.c.b16.xlu0 %v1452, 256
    %v1455 = vpop.permute.xlu0 %1454
    %v1456 = vlaneseq
    %v1457 = vshrl.u32 %v1456, 7
    %v1458 = vsub.s32 1, %v1457
    %v1459 = vrot.slane %v1440, %v1458
    %1461 = vbcast.lane.c.b16.xlu0 %v1459, 256
    %v1462 = vpop.permute.xlu0 %1461
    %v1463 = vlaneseq
    %v1464 = vshrl.u32 %v1463, 7
    %v1465 = vsub.s32 2, %v1464
    %v1466 = vrot.slane %v1430, %v1465
    %1468 = vbcast.lane.c.b16.xlu0 %v1466, 256
    %v1469 = vpop.permute.xlu0 %1468
    %v1470 = vlaneseq
    %v1471 = vshrl.u32 %v1470, 7
    %v1472 = vsub.s32 2, %v1471
    %v1473 = vrot.slane %v1440, %v1472
    %1475 = vbcast.lane.c.b16.xlu0 %v1473, 256
    %v1476 = vpop.permute.xlu0 %1475
    %v1477 = vlaneseq
    %v1478 = vshrl.u32 %v1477, 7
    %v1479 = vsub.s32 3, %v1478
    %v1480 = vrot.slane %v1430, %v1479
    %1482 = vbcast.lane.c.b16.xlu0 %v1480, 256
    %v1483 = vpop.permute.xlu0 %1482
    %v1484 = vlaneseq
    %v1485 = vshrl.u32 %v1484, 7
    %v1486 = vsub.s32 3, %v1485
    %v1487 = vrot.slane %v1440, %v1486
    %1489 = vbcast.lane.c.b16.xlu0 %v1487, 256
    %v1490 = vpop.permute.xlu0 %1489
    %v1491 = vlaneseq
    %v1492 = vshrl.u32 %v1491, 7
    %v1493 = vsub.s32 4, %v1492
    %v1494 = vrot.slane %v1430, %v1493
    %1496 = vbcast.lane.c.b16.xlu0 %v1494, 256
    %v1497 = vpop.permute.xlu0 %1496
    %v1498 = vlaneseq
    %v1499 = vshrl.u32 %v1498, 7
    %v1500 = vsub.s32 4, %v1499
    %v1501 = vrot.slane %v1440, %v1500
    %1503 = vbcast.lane.c.b16.xlu0 %v1501, 256
    %v1504 = vpop.permute.xlu0 %1503
    %v1505 = vlaneseq
    %v1506 = vshrl.u32 %v1505, 7
    %v1507 = vsub.s32 5, %v1506
    %v1508 = vrot.slane %v1430, %v1507
    %1510 = vbcast.lane.c.b16.xlu0 %v1508, 256
    %v1511 = vpop.permute.xlu0 %1510
    %v1512 = vlaneseq
    %v1513 = vshrl.u32 %v1512, 7
    %v1514 = vsub.s32 5, %v1513
    %v1515 = vrot.slane %v1440, %v1514
    %1517 = vbcast.lane.c.b16.xlu0 %v1515, 256
    %v1518 = vpop.permute.xlu0 %1517
    %v1519 = vlaneseq
    %v1520 = vshrl.u32 %v1519, 7
    %v1521 = vsub.s32 6, %v1520
    %v1522 = vrot.slane %v1430, %v1521
    %1524 = vbcast.lane.c.b16.xlu0 %v1522, 256
    %v1525 = vpop.permute.xlu0 %1524
    %v1526 = vlaneseq
    %v1527 = vshrl.u32 %v1526, 7
    %v1528 = vsub.s32 6, %v1527
    %v1529 = vrot.slane %v1440, %v1528
    %1531 = vbcast.lane.c.b16.xlu0 %v1529, 256
    %v1532 = vpop.permute.xlu0 %1531
    %v1533 = vlaneseq
    %v1534 = vshrl.u32 %v1533, 7
    %v1535 = vsub.s32 7, %v1534
    %v1536 = vrot.slane %v1430, %v1535
    %1538 = vbcast.lane.c.b16.xlu0 %v1536, 256
    %v1539 = vpop.permute.xlu0 %1538
    %v1540 = vlaneseq
    %v1541 = vshrl.u32 %v1540, 7
    %v1542 = vsub.s32 7, %v1541
    %v1543 = vrot.slane %v1440, %v1542
    %1545 = vbcast.lane.c.b16.xlu0 %v1543, 256
    %v1546 = vpop.permute.xlu0 %1545
    %vm1547 = vcmp.gt.bf16.partialorder %v1320, 0
    %vm1548 = vcmp.gt.bf16.partialorder %v1330, 0
    %vm1549 = vcmp.gt.bf16.partialorder %v1337, 0
    %vm1550 = vcmp.gt.bf16.partialorder %v1344, 0
    %vm1551 = vcmp.gt.bf16.partialorder %v1351, 0
    %vm1552 = vcmp.gt.bf16.partialorder %v1358, 0
    %vm1553 = vcmp.gt.bf16.partialorder %v1365, 0
    %vm1554 = vcmp.gt.bf16.partialorder %v1372, 0
    %vm1555 = vcmp.gt.bf16.partialorder %v1379, 0
    %vm1556 = vcmp.gt.bf16.partialorder %v1386, 0
    %vm1557 = vcmp.gt.bf16.partialorder %v1393, 0
    %vm1558 = vcmp.gt.bf16.partialorder %v1400, 0
    %vm1559 = vcmp.gt.bf16.partialorder %v1407, 0
    %vm1560 = vcmp.gt.bf16.partialorder %v1414, 0
    %vm1561 = vcmp.gt.bf16.partialorder %v1421, 0
    %vm1562 = vcmp.gt.bf16.partialorder %v1428, 0
    %vm1563 = vcmp.gt.bf16.partialorder %v1438, 0
    %vm1564 = vcmp.gt.bf16.partialorder %v1448, 0
    %vm1565 = vcmp.gt.bf16.partialorder %v1455, 0
    %vm1566 = vcmp.gt.bf16.partialorder %v1462, 0
    %vm1567 = vcmp.gt.bf16.partialorder %v1469, 0
    %vm1568 = vcmp.gt.bf16.partialorder %v1476, 0
    %vm1569 = vcmp.gt.bf16.partialorder %v1483, 0
    %vm1570 = vcmp.gt.bf16.partialorder %v1490, 0
    %vm1571 = vcmp.gt.bf16.partialorder %v1497, 0
    %vm1572 = vcmp.gt.bf16.partialorder %v1504, 0
    %vm1573 = vcmp.gt.bf16.partialorder %v1511, 0
    %vm1574 = vcmp.gt.bf16.partialorder %v1518, 0
    %vm1575 = vcmp.gt.bf16.partialorder %v1525, 0
    %vm1576 = vcmp.gt.bf16.partialorder %v1532, 0
    %vm1577 = vcmp.gt.bf16.partialorder %v1539, 0
    %vm1578 = vcmp.gt.bf16.partialorder %v1546, 0
    %v1579 = vsel %vm1547, 65537, 0
    %v1580 = vsel %vm1548, 65537, 0
    %v1581 = vsel %vm1549, 65537, 0
    %v1582 = vsel %vm1550, 65537, 0
    %v1583 = vsel %vm1551, 65537, 0
    %v1584 = vsel %vm1552, 65537, 0
    %v1585 = vsel %vm1553, 65537, 0
    %v1586 = vsel %vm1554, 65537, 0
    %v1587 = vsel %vm1555, 65537, 0
    %v1588 = vsel %vm1556, 65537, 0
    %v1589 = vsel %vm1557, 65537, 0
    %v1590 = vsel %vm1558, 65537, 0
    %v1591 = vsel %vm1559, 65537, 0
    %v1592 = vsel %vm1560, 65537, 0
    %v1593 = vsel %vm1561, 65537, 0
    %v1594 = vsel %vm1562, 65537, 0
    %v1595 = vsel %vm1563, 65537, 0
    %v1596 = vsel %vm1564, 65537, 0
    %v1597 = vsel %vm1565, 65537, 0
    %v1598 = vsel %vm1566, 65537, 0
    %v1599 = vsel %vm1567, 65537, 0
    %v1600 = vsel %vm1568, 65537, 0
    %v1601 = vsel %vm1569, 65537, 0
    %v1602 = vsel %vm1570, 65537, 0
    %v1603 = vsel %vm1571, 65537, 0
    %v1604 = vsel %vm1572, 65537, 0
    %v1605 = vsel %vm1573, 65537, 0
    %v1606 = vsel %vm1574, 65537, 0
    %v1607 = vsel %vm1575, 65537, 0
    %v1608 = vsel %vm1576, 65537, 0
    %v1609 = vsel %vm1577, 65537, 0
    %v1610 = vsel %vm1578, 65537, 0
    %v1611 = vunpack.c.l.b16 %v1579
    %v1612 = vunpack.c.l.b16 %v1580
    %v1613 = vunpack.c.l.b16 %v1581
    %v1614 = vunpack.c.l.b16 %v1582
    %v1615 = vunpack.c.l.b16 %v1583
    %v1616 = vunpack.c.l.b16 %v1584
    %v1617 = vunpack.c.l.b16 %v1585
    %v1618 = vunpack.c.l.b16 %v1586
    %v1619 = vunpack.c.l.b16 %v1587
    %v1620 = vunpack.c.l.b16 %v1588
    %v1621 = vunpack.c.l.b16 %v1589
    %v1622 = vunpack.c.l.b16 %v1590
    %v1623 = vunpack.c.l.b16 %v1591
    %v1624 = vunpack.c.l.b16 %v1592
    %v1625 = vunpack.c.l.b16 %v1593
    %v1626 = vunpack.c.l.b16 %v1594
    %v1627 = vunpack.c.l.b16 %v1595
    %v1628 = vunpack.c.l.b16 %v1596
    %v1629 = vunpack.c.l.b16 %v1597
    %v1630 = vunpack.c.l.b16 %v1598
    %v1631 = vunpack.c.l.b16 %v1599
    %v1632 = vunpack.c.l.b16 %v1600
    %v1633 = vunpack.c.l.b16 %v1601
    %v1634 = vunpack.c.l.b16 %v1602
    %v1635 = vunpack.c.l.b16 %v1603
    %v1636 = vunpack.c.l.b16 %v1604
    %v1637 = vunpack.c.l.b16 %v1605
    %v1638 = vunpack.c.l.b16 %v1606
    %v1639 = vunpack.c.l.b16 %v1607
    %v1640 = vunpack.c.l.b16 %v1608
    %v1641 = vunpack.c.l.b16 %v1609
    %v1642 = vunpack.c.l.b16 %v1610
    %vm1643 = vcmp.ne.s32.totalorder %v1611, 0
    %vm1644 = vcmp.ne.s32.totalorder %v1612, 0
    %vm1645 = vcmp.ne.s32.totalorder %v1613, 0
    %vm1646 = vcmp.ne.s32.totalorder %v1614, 0
    %vm1647 = vcmp.ne.s32.totalorder %v1615, 0
    %vm1648 = vcmp.ne.s32.totalorder %v1616, 0
    %vm1649 = vcmp.ne.s32.totalorder %v1617, 0
    %vm1650 = vcmp.ne.s32.totalorder %v1618, 0
    %vm1651 = vcmp.ne.s32.totalorder %v1619, 0
    %vm1652 = vcmp.ne.s32.totalorder %v1620, 0
    %vm1653 = vcmp.ne.s32.totalorder %v1621, 0
    %vm1654 = vcmp.ne.s32.totalorder %v1622, 0
    %vm1655 = vcmp.ne.s32.totalorder %v1623, 0
    %vm1656 = vcmp.ne.s32.totalorder %v1624, 0
    %vm1657 = vcmp.ne.s32.totalorder %v1625, 0
    %vm1658 = vcmp.ne.s32.totalorder %v1626, 0
    %vm1659 = vcmp.ne.s32.totalorder %v1627, 0
    %vm1660 = vcmp.ne.s32.totalorder %v1628, 0
    %vm1661 = vcmp.ne.s32.totalorder %v1629, 0
    %vm1662 = vcmp.ne.s32.totalorder %v1630, 0
    %vm1663 = vcmp.ne.s32.totalorder %v1631, 0
    %vm1664 = vcmp.ne.s32.totalorder %v1632, 0
    %vm1665 = vcmp.ne.s32.totalorder %v1633, 0
    %vm1666 = vcmp.ne.s32.totalorder %v1634, 0
    %vm1667 = vcmp.ne.s32.totalorder %v1635, 0
    %vm1668 = vcmp.ne.s32.totalorder %v1636, 0
    %vm1669 = vcmp.ne.s32.totalorder %v1637, 0
    %vm1670 = vcmp.ne.s32.totalorder %v1638, 0
    %vm1671 = vcmp.ne.s32.totalorder %v1639, 0
    %vm1672 = vcmp.ne.s32.totalorder %v1640, 0
    %vm1673 = vcmp.ne.s32.totalorder %v1641, 0
    %vm1674 = vcmp.ne.s32.totalorder %v1642, 0
    %v1675 = vsel %vm1643, 1, 0
    %v1676 = vsel %vm1644, 1, 0
    %v1677 = vsel %vm1645, 1, 0
    %v1678 = vsel %vm1646, 1, 0
    %v1679 = vsel %vm1647, 1, 0
    %v1680 = vsel %vm1648, 1, 0
    %v1681 = vsel %vm1649, 1, 0
    %v1682 = vsel %vm1650, 1, 0
    %v1683 = vsel %vm1651, 1, 0
    %v1684 = vsel %vm1652, 1, 0
    %v1685 = vsel %vm1653, 1, 0
    %v1686 = vsel %vm1654, 1, 0
    %v1687 = vsel %vm1655, 1, 0
    %v1688 = vsel %vm1656, 1, 0
    %v1689 = vsel %vm1657, 1, 0
    %v1690 = vsel %vm1658, 1, 0
    %v1691 = vsel %vm1659, 1, 0
    %v1692 = vsel %vm1660, 1, 0
    %v1693 = vsel %vm1661, 1, 0
    %v1694 = vsel %vm1662, 1, 0
    %v1695 = vsel %vm1663, 1, 0
    %v1696 = vsel %vm1664, 1, 0
    %v1697 = vsel %vm1665, 1, 0
    %v1698 = vsel %vm1666, 1, 0
    %v1699 = vsel %vm1667, 1, 0
    %v1700 = vsel %vm1668, 1, 0
    %v1701 = vsel %vm1669, 1, 0
    %v1702 = vsel %vm1670, 1, 0
    %v1703 = vsel %vm1671, 1, 0
    %v1704 = vsel %vm1672, 1, 0
    %v1705 = vsel %vm1673, 1, 0
    %v1706 = vsel %vm1674, 1, 0
    %1707 = vset.pattern.permute.xlu0 0
    %1708 = vperm.xlu0 %1707, %v1675
    %v1709 = vpop.permute.xlu0 %1708
    %1710 = vset.pattern.permute.xlu0 0
    %1711 = vperm.xlu0 %1710, %v1676
    %v1712 = vpop.permute.xlu0 %1711
    %1713 = vset.pattern.permute.xlu0 0
    %1714 = vperm.xlu0 %1713, %v1677
    %v1715 = vpop.permute.xlu0 %1714
    %1716 = vset.pattern.permute.xlu0 0
    %1717 = vperm.xlu0 %1716, %v1678
    %v1718 = vpop.permute.xlu0 %1717
    %1719 = vset.pattern.permute.xlu0 0
    %1720 = vperm.xlu0 %1719, %v1679
    %v1721 = vpop.permute.xlu0 %1720
    %1722 = vset.pattern.permute.xlu0 0
    %1723 = vperm.xlu0 %1722, %v1680
    %v1724 = vpop.permute.xlu0 %1723
    %1725 = vset.pattern.permute.xlu0 0
    %1726 = vperm.xlu0 %1725, %v1681
    %v1727 = vpop.permute.xlu0 %1726
    %1728 = vset.pattern.permute.xlu0 0
    %1729 = vperm.xlu0 %1728, %v1682
    %v1730 = vpop.permute.xlu0 %1729
    %1731 = vset.pattern.permute.xlu0 0
    %1732 = vperm.xlu0 %1731, %v1683
    %v1733 = vpop.permute.xlu0 %1732
    %1734 = vset.pattern.permute.xlu0 0
    %1735 = vperm.xlu0 %1734, %v1684
    %v1736 = vpop.permute.xlu0 %1735
    %1737 = vset.pattern.permute.xlu0 0
    %1738 = vperm.xlu0 %1737, %v1685
    %v1739 = vpop.permute.xlu0 %1738
    %1740 = vset.pattern.permute.xlu0 0
    %1741 = vperm.xlu0 %1740, %v1686
    %v1742 = vpop.permute.xlu0 %1741
    %1743 = vset.pattern.permute.xlu0 0
    %1744 = vperm.xlu0 %1743, %v1687
    %v1745 = vpop.permute.xlu0 %1744
    %1746 = vset.pattern.permute.xlu0 0
    %1747 = vperm.xlu0 %1746, %v1688
    %v1748 = vpop.permute.xlu0 %1747
    %1749 = vset.pattern.permute.xlu0 0
    %1750 = vperm.xlu0 %1749, %v1689
    %v1751 = vpop.permute.xlu0 %1750
    %1752 = vset.pattern.permute.xlu0 0
    %1753 = vperm.xlu0 %1752, %v1690
    %v1754 = vpop.permute.xlu0 %1753
    %1755 = vset.pattern.permute.xlu0 0
    %1756 = vperm.xlu0 %1755, %v1691
    %v1757 = vpop.permute.xlu0 %1756
    %1758 = vset.pattern.permute.xlu0 0
    %1759 = vperm.xlu0 %1758, %v1692
    %v1760 = vpop.permute.xlu0 %1759
    %1761 = vset.pattern.permute.xlu0 0
    %1762 = vperm.xlu0 %1761, %v1693
    %v1763 = vpop.permute.xlu0 %1762
    %1764 = vset.pattern.permute.xlu0 0
    %1765 = vperm.xlu0 %1764, %v1694
    %v1766 = vpop.permute.xlu0 %1765
    %1767 = vset.pattern.permute.xlu0 0
    %1768 = vperm.xlu0 %1767, %v1695
    %v1769 = vpop.permute.xlu0 %1768
    %1770 = vset.pattern.permute.xlu0 0
    %1771 = vperm.xlu0 %1770, %v1696
    %v1772 = vpop.permute.xlu0 %1771
    %1773 = vset.pattern.permute.xlu0 0
    %1774 = vperm.xlu0 %1773, %v1697
    %v1775 = vpop.permute.xlu0 %1774
    %1776 = vset.pattern.permute.xlu0 0
    %1777 = vperm.xlu0 %1776, %v1698
    %v1778 = vpop.permute.xlu0 %1777
    %1779 = vset.pattern.permute.xlu0 0
    %1780 = vperm.xlu0 %1779, %v1699
    %v1781 = vpop.permute.xlu0 %1780
    %1782 = vset.pattern.permute.xlu0 0
    %1783 = vperm.xlu0 %1782, %v1700
    %v1784 = vpop.permute.xlu0 %1783
    %1785 = vset.pattern.permute.xlu0 0
    %1786 = vperm.xlu0 %1785, %v1701
    %v1787 = vpop.permute.xlu0 %1786
    %1788 = vset.pattern.permute.xlu0 0
    %1789 = vperm.xlu0 %1788, %v1702
    %v1790 = vpop.permute.xlu0 %1789
    %1791 = vset.pattern.permute.xlu0 0
    %1792 = vperm.xlu0 %1791, %v1703
    %v1793 = vpop.permute.xlu0 %1792
    %1794 = vset.pattern.permute.xlu0 0
    %1795 = vperm.xlu0 %1794, %v1704
    %v1796 = vpop.permute.xlu0 %1795
    %1797 = vset.pattern.permute.xlu0 0
    %1798 = vperm.xlu0 %1797, %v1705
    %v1799 = vpop.permute.xlu0 %1798
    %1800 = vset.pattern.permute.xlu0 0
    %1801 = vperm.xlu0 %1800, %v1706
    %v1802 = vpop.permute.xlu0 %1801
    %vm1803 = vcmp.eq.s32.totalorder %v1709, 1
    %vm1804 = vcmp.eq.s32.totalorder %v1712, 1
    %vm1805 = vcmp.eq.s32.totalorder %v1715, 1
    %vm1806 = vcmp.eq.s32.totalorder %v1718, 1
    %vm1807 = vcmp.eq.s32.totalorder %v1721, 1
    %vm1808 = vcmp.eq.s32.totalorder %v1724, 1
    %vm1809 = vcmp.eq.s32.totalorder %v1727, 1
    %vm1810 = vcmp.eq.s32.totalorder %v1730, 1
    %vm1811 = vcmp.eq.s32.totalorder %v1733, 1
    %vm1812 = vcmp.eq.s32.totalorder %v1736, 1
    %vm1813 = vcmp.eq.s32.totalorder %v1739, 1
    %vm1814 = vcmp.eq.s32.totalorder %v1742, 1
    %vm1815 = vcmp.eq.s32.totalorder %v1745, 1
    %vm1816 = vcmp.eq.s32.totalorder %v1748, 1
    %vm1817 = vcmp.eq.s32.totalorder %v1751, 1
    %vm1818 = vcmp.eq.s32.totalorder %v1754, 1
    %vm1819 = vcmp.eq.s32.totalorder %v1757, 1
    %vm1820 = vcmp.eq.s32.totalorder %v1760, 1
    %vm1821 = vcmp.eq.s32.totalorder %v1763, 1
    %vm1822 = vcmp.eq.s32.totalorder %v1766, 1
    %vm1823 = vcmp.eq.s32.totalorder %v1769, 1
    %vm1824 = vcmp.eq.s32.totalorder %v1772, 1
    %vm1825 = vcmp.eq.s32.totalorder %v1775, 1
    %vm1826 = vcmp.eq.s32.totalorder %v1778, 1
    %vm1827 = vcmp.eq.s32.totalorder %v1781, 1
    %vm1828 = vcmp.eq.s32.totalorder %v1784, 1
    %vm1829 = vcmp.eq.s32.totalorder %v1787, 1
    %vm1830 = vcmp.eq.s32.totalorder %v1790, 1
    %vm1831 = vcmp.eq.s32.totalorder %v1793, 1
    %vm1832 = vcmp.eq.s32.totalorder %v1796, 1
    %vm1833 = vcmp.eq.s32.totalorder %v1799, 1
    %vm1834 = vcmp.eq.s32.totalorder %v1802, 1
    %v1835 = vsel %vm1803, %v1175, -3.4028235e+38
    %v1836 = vsel %vm1804, %v1178, -3.4028235e+38
    %v1837 = vsel %vm1805, %v1183, -3.4028235e+38
    %v1838 = vsel %vm1806, %v1186, -3.4028235e+38
    %v1839 = vsel %vm1807, %v1191, -3.4028235e+38
    %v1840 = vsel %vm1808, %v1194, -3.4028235e+38
    %v1841 = vsel %vm1809, %v1199, -3.4028235e+38
    %v1842 = vsel %vm1810, %v1202, -3.4028235e+38
    %v1843 = vsel %vm1811, %v1207, -3.4028235e+38
    %v1844 = vsel %vm1812, %v1210, -3.4028235e+38
    %v1845 = vsel %vm1813, %v1215, -3.4028235e+38
    %v1846 = vsel %vm1814, %v1218, -3.4028235e+38
    %v1847 = vsel %vm1815, %v1223, -3.4028235e+38
    %v1848 = vsel %vm1816, %v1226, -3.4028235e+38
    %v1849 = vsel %vm1817, %v1231, -3.4028235e+38
    %v1850 = vsel %vm1818, %v1234, -3.4028235e+38
    %v1851 = vsel %vm1819, %v1239, -3.4028235e+38
    %v1852 = vsel %vm1820, %v1242, -3.4028235e+38
    %v1853 = vsel %vm1821, %v1247, -3.4028235e+38
    %v1854 = vsel %vm1822, %v1250, -3.4028235e+38
    %v1855 = vsel %vm1823, %v1255, -3.4028235e+38
    %v1856 = vsel %vm1824, %v1258, -3.4028235e+38
    %v1857 = vsel %vm1825, %v1263, -3.4028235e+38
    %v1858 = vsel %vm1826, %v1266, -3.4028235e+38
    %v1859 = vsel %vm1827, %v1271, -3.4028235e+38
    %v1860 = vsel %vm1828, %v1274, -3.4028235e+38
    %v1861 = vsel %vm1829, %v1279, -3.4028235e+38
    %v1862 = vsel %vm1830, %v1282, -3.4028235e+38
    %v1863 = vsel %vm1831, %v1287, -3.4028235e+38
    %v1864 = vsel %vm1832, %v1290, -3.4028235e+38
    %v1865 = vsel %vm1833, %v1295, -3.4028235e+38
    %v1866 = vsel %vm1834, %v1298, -3.4028235e+38
    %v1867 = vsel %vm113, %v1835, -inf
    %v1868 = vrot.slane %v1867, 4
    %v1869 = vmax.f32 %v1867, %v1868
    %v1870 = vrot.slane %v1869, 2
    %v1871 = vmax.f32 %v1869, %v1870
    %v1872 = vrot.slane %v1871, 1
    %v1873 = vmax.f32 %v1871, %v1872
    %v1874 = vsel %vm113, %v1836, -inf
    %v1875 = vrot.slane %v1874, 4
    %v1876 = vmax.f32 %v1874, %v1875
    %v1877 = vrot.slane %v1876, 2
    %v1878 = vmax.f32 %v1876, %v1877
    %v1879 = vrot.slane %v1878, 1
    %v1880 = vmax.f32 %v1878, %v1879
    %v1881 = vsel %vm113, %v1837, -inf
    %v1882 = vrot.slane %v1881, 4
    %v1883 = vmax.f32 %v1881, %v1882
    %v1884 = vrot.slane %v1883, 2
    %v1885 = vmax.f32 %v1883, %v1884
    %v1886 = vrot.slane %v1885, 1
    %v1887 = vmax.f32 %v1885, %v1886
    %v1888 = vsel %vm113, %v1838, -inf
    %v1889 = vrot.slane %v1888, 4
    %v1890 = vmax.f32 %v1888, %v1889
    %v1891 = vrot.slane %v1890, 2
    %v1892 = vmax.f32 %v1890, %v1891
    %v1893 = vrot.slane %v1892, 1
    %v1894 = vmax.f32 %v1892, %v1893
    %v1895 = vsel %vm113, %v1839, -inf
    %v1896 = vrot.slane %v1895, 4
    %v1897 = vmax.f32 %v1895, %v1896
    %v1898 = vrot.slane %v1897, 2
    %v1899 = vmax.f32 %v1897, %v1898
    %v1900 = vrot.slane %v1899, 1
    %v1901 = vmax.f32 %v1899, %v1900
    %v1902 = vsel %vm113, %v1840, -inf
    %v1903 = vrot.slane %v1902, 4
    %v1904 = vmax.f32 %v1902, %v1903
    %v1905 = vrot.slane %v1904, 2
    %v1906 = vmax.f32 %v1904, %v1905
    %v1907 = vrot.slane %v1906, 1
    %v1908 = vmax.f32 %v1906, %v1907
    %v1909 = vsel %vm113, %v1841, -inf
    %v1910 = vrot.slane %v1909, 4
    %v1911 = vmax.f32 %v1909, %v1910
    %v1912 = vrot.slane %v1911, 2
    %v1913 = vmax.f32 %v1911, %v1912
    %v1914 = vrot.slane %v1913, 1
    %v1915 = vmax.f32 %v1913, %v1914
    %v1916 = vsel %vm113, %v1842, -inf
    %v1917 = vrot.slane %v1916, 4
    %v1918 = vmax.f32 %v1916, %v1917
    %v1919 = vrot.slane %v1918, 2
    %v1920 = vmax.f32 %v1918, %v1919
    %v1921 = vrot.slane %v1920, 1
    %v1922 = vmax.f32 %v1920, %v1921
    %v1923 = vsel %vm113, %v1843, -inf
    %v1924 = vrot.slane %v1923, 4
    %v1925 = vmax.f32 %v1923, %v1924
    %v1926 = vrot.slane %v1925, 2
    %v1927 = vmax.f32 %v1925, %v1926
    %v1928 = vrot.slane %v1927, 1
    %v1929 = vmax.f32 %v1927, %v1928
    %v1930 = vsel %vm113, %v1844, -inf
    %v1931 = vrot.slane %v1930, 4
    %v1932 = vmax.f32 %v1930, %v1931
    %v1933 = vrot.slane %v1932, 2
    %v1934 = vmax.f32 %v1932, %v1933
    %v1935 = vrot.slane %v1934, 1
    %v1936 = vmax.f32 %v1934, %v1935
    %v1937 = vsel %vm113, %v1845, -inf
    %v1938 = vrot.slane %v1937, 4
    %v1939 = vmax.f32 %v1937, %v1938
    %v1940 = vrot.slane %v1939, 2
    %v1941 = vmax.f32 %v1939, %v1940
    %v1942 = vrot.slane %v1941, 1
    %v1943 = vmax.f32 %v1941, %v1942
    %v1944 = vsel %vm113, %v1846, -inf
    %v1945 = vrot.slane %v1944, 4
    %v1946 = vmax.f32 %v1944, %v1945
    %v1947 = vrot.slane %v1946, 2
    %v1948 = vmax.f32 %v1946, %v1947
    %v1949 = vrot.slane %v1948, 1
    %v1950 = vmax.f32 %v1948, %v1949
    %v1951 = vsel %vm113, %v1847, -inf
    %v1952 = vrot.slane %v1951, 4
    %v1953 = vmax.f32 %v1951, %v1952
    %v1954 = vrot.slane %v1953, 2
    %v1955 = vmax.f32 %v1953, %v1954
    %v1956 = vrot.slane %v1955, 1
    %v1957 = vmax.f32 %v1955, %v1956
    %v1958 = vsel %vm113, %v1848, -inf
    %v1959 = vrot.slane %v1958, 4
    %v1960 = vmax.f32 %v1958, %v1959
    %v1961 = vrot.slane %v1960, 2
    %v1962 = vmax.f32 %v1960, %v1961
    %v1963 = vrot.slane %v1962, 1
    %v1964 = vmax.f32 %v1962, %v1963
    %v1965 = vsel %vm113, %v1849, -inf
    %v1966 = vrot.slane %v1965, 4
    %v1967 = vmax.f32 %v1965, %v1966
    %v1968 = vrot.slane %v1967, 2
    %v1969 = vmax.f32 %v1967, %v1968
    %v1970 = vrot.slane %v1969, 1
    %v1971 = vmax.f32 %v1969, %v1970
    %v1972 = vsel %vm113, %v1850, -inf
    %v1973 = vrot.slane %v1972, 4
    %v1974 = vmax.f32 %v1972, %v1973
    %v1975 = vrot.slane %v1974, 2
    %v1976 = vmax.f32 %v1974, %v1975
    %v1977 = vrot.slane %v1976, 1
    %v1978 = vmax.f32 %v1976, %v1977
    %v1979 = vsel %vm113, %v1851, -inf
    %v1980 = vrot.slane %v1979, 4
    %v1981 = vmax.f32 %v1979, %v1980
    %v1982 = vrot.slane %v1981, 2
    %v1983 = vmax.f32 %v1981, %v1982
    %v1984 = vrot.slane %v1983, 1
    %v1985 = vmax.f32 %v1983, %v1984
    %v1986 = vsel %vm113, %v1852, -inf
    %v1987 = vrot.slane %v1986, 4
    %v1988 = vmax.f32 %v1986, %v1987
    %v1989 = vrot.slane %v1988, 2
    %v1990 = vmax.f32 %v1988, %v1989
    %v1991 = vrot.slane %v1990, 1
    %v1992 = vmax.f32 %v1990, %v1991
    %v1993 = vsel %vm113, %v1853, -inf
    %v1994 = vrot.slane %v1993, 4
    %v1995 = vmax.f32 %v1993, %v1994
    %v1996 = vrot.slane %v1995, 2
    %v1997 = vmax.f32 %v1995, %v1996
    %v1998 = vrot.slane %v1997, 1
    %v1999 = vmax.f32 %v1997, %v1998
    %v2000 = vsel %vm113, %v1854, -inf
    %v2001 = vrot.slane %v2000, 4
    %v2002 = vmax.f32 %v2000, %v2001
    %v2003 = vrot.slane %v2002, 2
    %v2004 = vmax.f32 %v2002, %v2003
    %v2005 = vrot.slane %v2004, 1
    %v2006 = vmax.f32 %v2004, %v2005
    %v2007 = vsel %vm113, %v1855, -inf
    %v2008 = vrot.slane %v2007, 4
    %v2009 = vmax.f32 %v2007, %v2008
    %v2010 = vrot.slane %v2009, 2
    %v2011 = vmax.f32 %v2009, %v2010
    %v2012 = vrot.slane %v2011, 1
    %v2013 = vmax.f32 %v2011, %v2012
    %v2014 = vsel %vm113, %v1856, -inf
    %v2015 = vrot.slane %v2014, 4
    %v2016 = vmax.f32 %v2014, %v2015
    %v2017 = vrot.slane %v2016, 2
    %v2018 = vmax.f32 %v2016, %v2017
    %v2019 = vrot.slane %v2018, 1
    %v2020 = vmax.f32 %v2018, %v2019
    %v2021 = vsel %vm113, %v1857, -inf
    %v2022 = vrot.slane %v2021, 4
    %v2023 = vmax.f32 %v2021, %v2022
    %v2024 = vrot.slane %v2023, 2
    %v2025 = vmax.f32 %v2023, %v2024
    %v2026 = vrot.slane %v2025, 1
    %v2027 = vmax.f32 %v2025, %v2026
    %v2028 = vsel %vm113, %v1858, -inf
    %v2029 = vrot.slane %v2028, 4
    %v2030 = vmax.f32 %v2028, %v2029
    %v2031 = vrot.slane %v2030, 2
    %v2032 = vmax.f32 %v2030, %v2031
    %v2033 = vrot.slane %v2032, 1
    %v2034 = vmax.f32 %v2032, %v2033
    %v2035 = vsel %vm113, %v1859, -inf
    %v2036 = vrot.slane %v2035, 4
    %v2037 = vmax.f32 %v2035, %v2036
    %v2038 = vrot.slane %v2037, 2
    %v2039 = vmax.f32 %v2037, %v2038
    %v2040 = vrot.slane %v2039, 1
    %v2041 = vmax.f32 %v2039, %v2040
    %v2042 = vsel %vm113, %v1860, -inf
    %v2043 = vrot.slane %v2042, 4
    %v2044 = vmax.f32 %v2042, %v2043
    %v2045 = vrot.slane %v2044, 2
    %v2046 = vmax.f32 %v2044, %v2045
    %v2047 = vrot.slane %v2046, 1
    %v2048 = vmax.f32 %v2046, %v2047
    %v2049 = vsel %vm113, %v1861, -inf
    %v2050 = vrot.slane %v2049, 4
    %v2051 = vmax.f32 %v2049, %v2050
    %v2052 = vrot.slane %v2051, 2
    %v2053 = vmax.f32 %v2051, %v2052
    %v2054 = vrot.slane %v2053, 1
    %v2055 = vmax.f32 %v2053, %v2054
    %v2056 = vsel %vm113, %v1862, -inf
    %v2057 = vrot.slane %v2056, 4
    %v2058 = vmax.f32 %v2056, %v2057
    %v2059 = vrot.slane %v2058, 2
    %v2060 = vmax.f32 %v2058, %v2059
    %v2061 = vrot.slane %v2060, 1
    %v2062 = vmax.f32 %v2060, %v2061
    %v2063 = vsel %vm113, %v1863, -inf
    %v2064 = vrot.slane %v2063, 4
    %v2065 = vmax.f32 %v2063, %v2064
    %v2066 = vrot.slane %v2065, 2
    %v2067 = vmax.f32 %v2065, %v2066
    %v2068 = vrot.slane %v2067, 1
    %v2069 = vmax.f32 %v2067, %v2068
    %v2070 = vsel %vm113, %v1864, -inf
    %v2071 = vrot.slane %v2070, 4
    %v2072 = vmax.f32 %v2070, %v2071
    %v2073 = vrot.slane %v2072, 2
    %v2074 = vmax.f32 %v2072, %v2073
    %v2075 = vrot.slane %v2074, 1
    %v2076 = vmax.f32 %v2074, %v2075
    %v2077 = vsel %vm113, %v1865, -inf
    %v2078 = vrot.slane %v2077, 4
    %v2079 = vmax.f32 %v2077, %v2078
    %v2080 = vrot.slane %v2079, 2
    %v2081 = vmax.f32 %v2079, %v2080
    %v2082 = vrot.slane %v2081, 1
    %v2083 = vmax.f32 %v2081, %v2082
    %v2084 = vsel %vm113, %v1866, -inf
    %v2085 = vrot.slane %v2084, 4
    %v2086 = vmax.f32 %v2084, %v2085
    %v2087 = vrot.slane %v2086, 2
    %v2088 = vmax.f32 %v2086, %v2087
    %v2089 = vrot.slane %v2088, 1
    %v2090 = vmax.f32 %v2088, %v2089
    %v2091 = vsub.f32 %v1835, %v1873
    %v2092 = vsub.f32 %v1836, %v1880
    %v2093 = vsub.f32 %v1837, %v1887
    %v2094 = vsub.f32 %v1838, %v1894
    %v2095 = vsub.f32 %v1839, %v1901
    %v2096 = vsub.f32 %v1840, %v1908
    %v2097 = vsub.f32 %v1841, %v1915
    %v2098 = vsub.f32 %v1842, %v1922
    %v2099 = vsub.f32 %v1843, %v1929
    %v2100 = vsub.f32 %v1844, %v1936
    %v2101 = vsub.f32 %v1845, %v1943
    %v2102 = vsub.f32 %v1846, %v1950
    %v2103 = vsub.f32 %v1847, %v1957
    %v2104 = vsub.f32 %v1848, %v1964
    %v2105 = vsub.f32 %v1849, %v1971
    %v2106 = vsub.f32 %v1850, %v1978
    %v2107 = vsub.f32 %v1851, %v1985
    %v2108 = vsub.f32 %v1852, %v1992
    %v2109 = vsub.f32 %v1853, %v1999
    %v2110 = vsub.f32 %v1854, %v2006
    %v2111 = vsub.f32 %v1855, %v2013
    %v2112 = vsub.f32 %v1856, %v2020
    %v2113 = vsub.f32 %v1857, %v2027
    %v2114 = vsub.f32 %v1858, %v2034
    %v2115 = vsub.f32 %v1859, %v2041
    %v2116 = vsub.f32 %v1860, %v2048
    %v2117 = vsub.f32 %v1861, %v2055
    %v2118 = vsub.f32 %v1862, %v2062
    %v2119 = vsub.f32 %v1863, %v2069
    %v2120 = vsub.f32 %v1864, %v2076
    %v2121 = vsub.f32 %v1865, %v2083
    %v2122 = vsub.f32 %v1866, %v2090
    %v2123 = vmul.f32 %v2091, 1.442695
    %v2124 = vpow.pop %v2123
    %v2125 = vmul.f32 %v2092, 1.442695
    %v2126 = vpow.pop %v2125
    %v2127 = vmul.f32 %v2093, 1.442695
    %v2128 = vpow.pop %v2127
    %v2129 = vmul.f32 %v2094, 1.442695
    %v2130 = vpow.pop %v2129
    %v2131 = vmul.f32 %v2095, 1.442695
    %v2132 = vpow.pop %v2131
    %v2133 = vmul.f32 %v2096, 1.442695
    %v2134 = vpow.pop %v2133
    %v2135 = vmul.f32 %v2097, 1.442695
    %v2136 = vpow.pop %v2135
    %v2137 = vmul.f32 %v2098, 1.442695
    %v2138 = vpow.pop %v2137
    %v2139 = vmul.f32 %v2099, 1.442695
    %v2140 = vpow.pop %v2139
    %v2141 = vmul.f32 %v2100, 1.442695
    %v2142 = vpow.pop %v2141
    %v2143 = vmul.f32 %v2101, 1.442695
    %v2144 = vpow.pop %v2143
    %v2145 = vmul.f32 %v2102, 1.442695
    %v2146 = vpow.pop %v2145
    %v2147 = vmul.f32 %v2103, 1.442695
    %v2148 = vpow.pop %v2147
    %v2149 = vmul.f32 %v2104, 1.442695
    %v2150 = vpow.pop %v2149
    %v2151 = vmul.f32 %v2105, 1.442695
    %v2152 = vpow.pop %v2151
    %v2153 = vmul.f32 %v2106, 1.442695
    %v2154 = vpow.pop %v2153
    %v2155 = vmul.f32 %v2107, 1.442695
    %v2156 = vpow.pop %v2155
    %v2157 = vmul.f32 %v2108, 1.442695
    %v2158 = vpow.pop %v2157
    %v2159 = vmul.f32 %v2109, 1.442695
    %v2160 = vpow.pop %v2159
    %v2161 = vmul.f32 %v2110, 1.442695
    %v2162 = vpow.pop %v2161
    %v2163 = vmul.f32 %v2111, 1.442695
    %v2164 = vpow.pop %v2163
    %v2165 = vmul.f32 %v2112, 1.442695
    %v2166 = vpow.pop %v2165
    %v2167 = vmul.f32 %v2113, 1.442695
    %v2168 = vpow.pop %v2167
    %v2169 = vmul.f32 %v2114, 1.442695
    %v2170 = vpow.pop %v2169
    %v2171 = vmul.f32 %v2115, 1.442695
    %v2172 = vpow.pop %v2171
    %v2173 = vmul.f32 %v2116, 1.442695
    %v2174 = vpow.pop %v2173
    %v2175 = vmul.f32 %v2117, 1.442695
    %v2176 = vpow.pop %v2175
    %v2177 = vmul.f32 %v2118, 1.442695
    %v2178 = vpow.pop %v2177
    %v2179 = vmul.f32 %v2119, 1.442695
    %v2180 = vpow.pop %v2179
    %v2181 = vmul.f32 %v2120, 1.442695
    %v2182 = vpow.pop %v2181
    %v2183 = vmul.f32 %v2121, 1.442695
    %v2184 = vpow.pop %v2183
    %v2185 = vmul.f32 %v2122, 1.442695
    %v2186 = vpow.pop %v2185
    %v2187 = vsel %vm113, %v2124, 0.0
    %v2188 = vrot.slane %v2187, 4
    %v2189 = vadd.f32 %v2187, %v2188
    %v2190 = vrot.slane %v2189, 2
    %v2191 = vadd.f32 %v2189, %v2190
    %v2192 = vrot.slane %v2191, 1
    %v2193 = vadd.f32 %v2191, %v2192
    %v2194 = vsel %vm113, %v2126, 0.0
    %v2195 = vrot.slane %v2194, 4
    %v2196 = vadd.f32 %v2194, %v2195
    %v2197 = vrot.slane %v2196, 2
    %v2198 = vadd.f32 %v2196, %v2197
    %v2199 = vrot.slane %v2198, 1
    %v2200 = vadd.f32 %v2198, %v2199
    %v2201 = vsel %vm113, %v2128, 0.0
    %v2202 = vrot.slane %v2201, 4
    %v2203 = vadd.f32 %v2201, %v2202
    %v2204 = vrot.slane %v2203, 2
    %v2205 = vadd.f32 %v2203, %v2204
    %v2206 = vrot.slane %v2205, 1
    %v2207 = vadd.f32 %v2205, %v2206
    %v2208 = vsel %vm113, %v2130, 0.0
    %v2209 = vrot.slane %v2208, 4
    %v2210 = vadd.f32 %v2208, %v2209
    %v2211 = vrot.slane %v2210, 2
    %v2212 = vadd.f32 %v2210, %v2211
    %v2213 = vrot.slane %v2212, 1
    %v2214 = vadd.f32 %v2212, %v2213
    %v2215 = vsel %vm113, %v2132, 0.0
    %v2216 = vrot.slane %v2215, 4
    %v2217 = vadd.f32 %v2215, %v2216
    %v2218 = vrot.slane %v2217, 2
    %v2219 = vadd.f32 %v2217, %v2218
    %v2220 = vrot.slane %v2219, 1
    %v2221 = vadd.f32 %v2219, %v2220
    %v2222 = vsel %vm113, %v2134, 0.0
    %v2223 = vrot.slane %v2222, 4
    %v2224 = vadd.f32 %v2222, %v2223
    %v2225 = vrot.slane %v2224, 2
    %v2226 = vadd.f32 %v2224, %v2225
    %v2227 = vrot.slane %v2226, 1
    %v2228 = vadd.f32 %v2226, %v2227
    %v2229 = vsel %vm113, %v2136, 0.0
    %v2230 = vrot.slane %v2229, 4
    %v2231 = vadd.f32 %v2229, %v2230
    %v2232 = vrot.slane %v2231, 2
    %v2233 = vadd.f32 %v2231, %v2232
    %v2234 = vrot.slane %v2233, 1
    %v2235 = vadd.f32 %v2233, %v2234
    %v2236 = vsel %vm113, %v2138, 0.0
    %v2237 = vrot.slane %v2236, 4
    %v2238 = vadd.f32 %v2236, %v2237
    %v2239 = vrot.slane %v2238, 2
    %v2240 = vadd.f32 %v2238, %v2239
    %v2241 = vrot.slane %v2240, 1
    %v2242 = vadd.f32 %v2240, %v2241
    %v2243 = vsel %vm113, %v2140, 0.0
    %v2244 = vrot.slane %v2243, 4
    %v2245 = vadd.f32 %v2243, %v2244
    %v2246 = vrot.slane %v2245, 2
    %v2247 = vadd.f32 %v2245, %v2246
    %v2248 = vrot.slane %v2247, 1
    %v2249 = vadd.f32 %v2247, %v2248
    %v2250 = vsel %vm113, %v2142, 0.0
    %v2251 = vrot.slane %v2250, 4
    %v2252 = vadd.f32 %v2250, %v2251
    %v2253 = vrot.slane %v2252, 2
    %v2254 = vadd.f32 %v2252, %v2253
    %v2255 = vrot.slane %v2254, 1
    %v2256 = vadd.f32 %v2254, %v2255
    %v2257 = vsel %vm113, %v2144, 0.0
    %v2258 = vrot.slane %v2257, 4
    %v2259 = vadd.f32 %v2257, %v2258
    %v2260 = vrot.slane %v2259, 2
    %v2261 = vadd.f32 %v2259, %v2260
    %v2262 = vrot.slane %v2261, 1
    %v2263 = vadd.f32 %v2261, %v2262
    %v2264 = vsel %vm113, %v2146, 0.0
    %v2265 = vrot.slane %v2264, 4
    %v2266 = vadd.f32 %v2264, %v2265
    %v2267 = vrot.slane %v2266, 2
    %v2268 = vadd.f32 %v2266, %v2267
    %v2269 = vrot.slane %v2268, 1
    %v2270 = vadd.f32 %v2268, %v2269
    %v2271 = vsel %vm113, %v2148, 0.0
    %v2272 = vrot.slane %v2271, 4
    %v2273 = vadd.f32 %v2271, %v2272
    %v2274 = vrot.slane %v2273, 2
    %v2275 = vadd.f32 %v2273, %v2274
    %v2276 = vrot.slane %v2275, 1
    %v2277 = vadd.f32 %v2275, %v2276
    %v2278 = vsel %vm113, %v2150, 0.0
    %v2279 = vrot.slane %v2278, 4
    %v2280 = vadd.f32 %v2278, %v2279
    %v2281 = vrot.slane %v2280, 2
    %v2282 = vadd.f32 %v2280, %v2281
    %v2283 = vrot.slane %v2282, 1
    %v2284 = vadd.f32 %v2282, %v2283
    %v2285 = vsel %vm113, %v2152, 0.0
    %v2286 = vrot.slane %v2285, 4
    %v2287 = vadd.f32 %v2285, %v2286
    %v2288 = vrot.slane %v2287, 2
    %v2289 = vadd.f32 %v2287, %v2288
    %v2290 = vrot.slane %v2289, 1
    %v2291 = vadd.f32 %v2289, %v2290
    %v2292 = vsel %vm113, %v2154, 0.0
    %v2293 = vrot.slane %v2292, 4
    %v2294 = vadd.f32 %v2292, %v2293
    %v2295 = vrot.slane %v2294, 2
    %v2296 = vadd.f32 %v2294, %v2295
    %v2297 = vrot.slane %v2296, 1
    %v2298 = vadd.f32 %v2296, %v2297
    %v2299 = vsel %vm113, %v2156, 0.0
    %v2300 = vrot.slane %v2299, 4
    %v2301 = vadd.f32 %v2299, %v2300
    %v2302 = vrot.slane %v2301, 2
    %v2303 = vadd.f32 %v2301, %v2302
    %v2304 = vrot.slane %v2303, 1
    %v2305 = vadd.f32 %v2303, %v2304
    %v2306 = vsel %vm113, %v2158, 0.0
    %v2307 = vrot.slane %v2306, 4
    %v2308 = vadd.f32 %v2306, %v2307
    %v2309 = vrot.slane %v2308, 2
    %v2310 = vadd.f32 %v2308, %v2309
    %v2311 = vrot.slane %v2310, 1
    %v2312 = vadd.f32 %v2310, %v2311
    %v2313 = vsel %vm113, %v2160, 0.0
    %v2314 = vrot.slane %v2313, 4
    %v2315 = vadd.f32 %v2313, %v2314
    %v2316 = vrot.slane %v2315, 2
    %v2317 = vadd.f32 %v2315, %v2316
    %v2318 = vrot.slane %v2317, 1
    %v2319 = vadd.f32 %v2317, %v2318
    %v2320 = vsel %vm113, %v2162, 0.0
    %v2321 = vrot.slane %v2320, 4
    %v2322 = vadd.f32 %v2320, %v2321
    %v2323 = vrot.slane %v2322, 2
    %v2324 = vadd.f32 %v2322, %v2323
    %v2325 = vrot.slane %v2324, 1
    %v2326 = vadd.f32 %v2324, %v2325
    %v2327 = vsel %vm113, %v2164, 0.0
    %v2328 = vrot.slane %v2327, 4
    %v2329 = vadd.f32 %v2327, %v2328
    %v2330 = vrot.slane %v2329, 2
    %v2331 = vadd.f32 %v2329, %v2330
    %v2332 = vrot.slane %v2331, 1
    %v2333 = vadd.f32 %v2331, %v2332
    %v2334 = vsel %vm113, %v2166, 0.0
    %v2335 = vrot.slane %v2334, 4
    %v2336 = vadd.f32 %v2334, %v2335
    %v2337 = vrot.slane %v2336, 2
    %v2338 = vadd.f32 %v2336, %v2337
    %v2339 = vrot.slane %v2338, 1
    %v2340 = vadd.f32 %v2338, %v2339
    %v2341 = vsel %vm113, %v2168, 0.0
    %v2342 = vrot.slane %v2341, 4
    %v2343 = vadd.f32 %v2341, %v2342
    %v2344 = vrot.slane %v2343, 2
    %v2345 = vadd.f32 %v2343, %v2344
    %v2346 = vrot.slane %v2345, 1
    %v2347 = vadd.f32 %v2345, %v2346
    %v2348 = vsel %vm113, %v2170, 0.0
    %v2349 = vrot.slane %v2348, 4
    %v2350 = vadd.f32 %v2348, %v2349
    %v2351 = vrot.slane %v2350, 2
    %v2352 = vadd.f32 %v2350, %v2351
    %v2353 = vrot.slane %v2352, 1
    %v2354 = vadd.f32 %v2352, %v2353
    %v2355 = vsel %vm113, %v2172, 0.0
    %v2356 = vrot.slane %v2355, 4
    %v2357 = vadd.f32 %v2355, %v2356
    %v2358 = vrot.slane %v2357, 2
    %v2359 = vadd.f32 %v2357, %v2358
    %v2360 = vrot.slane %v2359, 1
    %v2361 = vadd.f32 %v2359, %v2360
    %v2362 = vsel %vm113, %v2174, 0.0
    %v2363 = vrot.slane %v2362, 4
    %v2364 = vadd.f32 %v2362, %v2363
    %v2365 = vrot.slane %v2364, 2
    %v2366 = vadd.f32 %v2364, %v2365
    %v2367 = vrot.slane %v2366, 1
    %v2368 = vadd.f32 %v2366, %v2367
    %v2369 = vsel %vm113, %v2176, 0.0
    %v2370 = vrot.slane %v2369, 4
    %v2371 = vadd.f32 %v2369, %v2370
    %v2372 = vrot.slane %v2371, 2
    %v2373 = vadd.f32 %v2371, %v2372
    %v2374 = vrot.slane %v2373, 1
    %v2375 = vadd.f32 %v2373, %v2374
    %v2376 = vsel %vm113, %v2178, 0.0
    %v2377 = vrot.slane %v2376, 4
    %v2378 = vadd.f32 %v2376, %v2377
    %v2379 = vrot.slane %v2378, 2
    %v2380 = vadd.f32 %v2378, %v2379
    %v2381 = vrot.slane %v2380, 1
    %v2382 = vadd.f32 %v2380, %v2381
    %v2383 = vsel %vm113, %v2180, 0.0
    %v2384 = vrot.slane %v2383, 4
    %v2385 = vadd.f32 %v2383, %v2384
    %v2386 = vrot.slane %v2385, 2
    %v2387 = vadd.f32 %v2385, %v2386
    %v2388 = vrot.slane %v2387, 1
    %v2389 = vadd.f32 %v2387, %v2388
    %v2390 = vsel %vm113, %v2182, 0.0
    %v2391 = vrot.slane %v2390, 4
    %v2392 = vadd.f32 %v2390, %v2391
    %v2393 = vrot.slane %v2392, 2
    %v2394 = vadd.f32 %v2392, %v2393
    %v2395 = vrot.slane %v2394, 1
    %v2396 = vadd.f32 %v2394, %v2395
    %v2397 = vsel %vm113, %v2184, 0.0
    %v2398 = vrot.slane %v2397, 4
    %v2399 = vadd.f32 %v2397, %v2398
    %v2400 = vrot.slane %v2399, 2
    %v2401 = vadd.f32 %v2399, %v2400
    %v2402 = vrot.slane %v2401, 1
    %v2403 = vadd.f32 %v2401, %v2402
    %v2404 = vsel %vm113, %v2186, 0.0
    %v2405 = vrot.slane %v2404, 4
    %v2406 = vadd.f32 %v2404, %v2405
    %v2407 = vrot.slane %v2406, 2
    %v2408 = vadd.f32 %v2406, %v2407
    %v2409 = vrot.slane %v2408, 1
    %v2410 = vadd.f32 %v2408, %v2409
    %v2411 = vrcp.pop %v2193
    %v2412 = vrcp.pop %v2200
    %v2413 = vrcp.pop %v2207
    %v2414 = vrcp.pop %v2214
    %v2415 = vrcp.pop %v2221
    %v2416 = vrcp.pop %v2228
    %v2417 = vrcp.pop %v2235
    %v2418 = vrcp.pop %v2242
    %v2419 = vrcp.pop %v2249
    %v2420 = vrcp.pop %v2256
    %v2421 = vrcp.pop %v2263
    %v2422 = vrcp.pop %v2270
    %v2423 = vrcp.pop %v2277
    %v2424 = vrcp.pop %v2284
    %v2425 = vrcp.pop %v2291
    %v2426 = vrcp.pop %v2298
    %v2427 = vrcp.pop %v2305
    %v2428 = vrcp.pop %v2312
    %v2429 = vrcp.pop %v2319
    %v2430 = vrcp.pop %v2326
    %v2431 = vrcp.pop %v2333
    %v2432 = vrcp.pop %v2340
    %v2433 = vrcp.pop %v2347
    %v2434 = vrcp.pop %v2354
    %v2435 = vrcp.pop %v2361
    %v2436 = vrcp.pop %v2368
    %v2437 = vrcp.pop %v2375
    %v2438 = vrcp.pop %v2382
    %v2439 = vrcp.pop %v2389
    %v2440 = vrcp.pop %v2396
    %v2441 = vrcp.pop %v2403
    %v2442 = vrcp.pop %v2410
    %v2443 = vmul.f32 %v2124, %v2411
    %v2444 = vmul.f32 %v2126, %v2412
    %v2445 = vmul.f32 %v2128, %v2413
    %v2446 = vmul.f32 %v2130, %v2414
    %v2447 = vmul.f32 %v2132, %v2415
    %v2448 = vmul.f32 %v2134, %v2416
    %v2449 = vmul.f32 %v2136, %v2417
    %v2450 = vmul.f32 %v2138, %v2418
    %v2451 = vmul.f32 %v2140, %v2419
    %v2452 = vmul.f32 %v2142, %v2420
    %v2453 = vmul.f32 %v2144, %v2421
    %v2454 = vmul.f32 %v2146, %v2422
    %v2455 = vmul.f32 %v2148, %v2423
    %v2456 = vmul.f32 %v2150, %v2424
    %v2457 = vmul.f32 %v2152, %v2425
    %v2458 = vmul.f32 %v2154, %v2426
    %v2459 = vmul.f32 %v2156, %v2427
    %v2460 = vmul.f32 %v2158, %v2428
    %v2461 = vmul.f32 %v2160, %v2429
    %v2462 = vmul.f32 %v2162, %v2430
    %v2463 = vmul.f32 %v2164, %v2431
    %v2464 = vmul.f32 %v2166, %v2432
    %v2465 = vmul.f32 %v2168, %v2433
    %v2466 = vmul.f32 %v2170, %v2434
    %v2467 = vmul.f32 %v2172, %v2435
    %v2468 = vmul.f32 %v2174, %v2436
    %v2469 = vmul.f32 %v2176, %v2437
    %v2470 = vmul.f32 %v2178, %v2438
    %v2471 = vmul.f32 %v2180, %v2439
    %v2472 = vmul.f32 %v2182, %v2440
    %v2473 = vmul.f32 %v2184, %v2441
    %v2474 = vmul.f32 %v2186, %v2442
    %v2475 = vsel %vm1803, %v2443, 0.0
    %v2476 = vsel %vm1804, %v2444, 0.0
    %v2477 = vsel %vm1805, %v2445, 0.0
    %v2478 = vsel %vm1806, %v2446, 0.0
    %v2479 = vsel %vm1807, %v2447, 0.0
    %v2480 = vsel %vm1808, %v2448, 0.0
    %v2481 = vsel %vm1809, %v2449, 0.0
    %v2482 = vsel %vm1810, %v2450, 0.0
    %v2483 = vsel %vm1811, %v2451, 0.0
    %v2484 = vsel %vm1812, %v2452, 0.0
    %v2485 = vsel %vm1813, %v2453, 0.0
    %v2486 = vsel %vm1814, %v2454, 0.0
    %v2487 = vsel %vm1815, %v2455, 0.0
    %v2488 = vsel %vm1816, %v2456, 0.0
    %v2489 = vsel %vm1817, %v2457, 0.0
    %v2490 = vsel %vm1818, %v2458, 0.0
    %v2491 = vsel %vm1819, %v2459, 0.0
    %v2492 = vsel %vm1820, %v2460, 0.0
    %v2493 = vsel %vm1821, %v2461, 0.0
    %v2494 = vsel %vm1822, %v2462, 0.0
    %v2495 = vsel %vm1823, %v2463, 0.0
    %v2496 = vsel %vm1824, %v2464, 0.0
    %v2497 = vsel %vm1825, %v2465, 0.0
    %v2498 = vsel %vm1826, %v2466, 0.0
    %v2499 = vsel %vm1827, %v2467, 0.0
    %v2500 = vsel %vm1828, %v2468, 0.0
    %v2501 = vsel %vm1829, %v2469, 0.0
    %v2502 = vsel %vm1830, %v2470, 0.0
    %v2503 = vsel %vm1831, %v2471, 0.0
    %v2504 = vsel %vm1832, %v2472, 0.0
    %v2505 = vsel %vm1833, %v2473, 0.0
    %v2506 = vsel %vm1834, %v2474, 0.0
    %v2507 = vmul.f32 %v2475, %v542
    %v2508 = vmul.f32 %v2476, %v545
    %v2509 = vmul.f32 %v2477, %v550
    %v2510 = vmul.f32 %v2478, %v553
    %v2511 = vmul.f32 %v2479, %v558
    %v2512 = vmul.f32 %v2480, %v561
    %v2513 = vmul.f32 %v2481, %v566
    %v2514 = vmul.f32 %v2482, %v569
    %v2515 = vmul.f32 %v2483, %v574
    %v2516 = vmul.f32 %v2484, %v577
    %v2517 = vmul.f32 %v2485, %v582
    %v2518 = vmul.f32 %v2486, %v585
    %v2519 = vmul.f32 %v2487, %v590
    %v2520 = vmul.f32 %v2488, %v593
    %v2521 = vmul.f32 %v2489, %v598
    %v2522 = vmul.f32 %v2490, %v601
    %v2523 = vmul.f32 %v2491, %v606
    %v2524 = vmul.f32 %v2492, %v609
    %v2525 = vmul.f32 %v2493, %v614
    %v2526 = vmul.f32 %v2494, %v617
    %v2527 = vmul.f32 %v2495, %v622
    %v2528 = vmul.f32 %v2496, %v625
    %v2529 = vmul.f32 %v2497, %v630
    %v2530 = vmul.f32 %v2498, %v633
    %v2531 = vmul.f32 %v2499, %v638
    %v2532 = vmul.f32 %v2500, %v641
    %v2533 = vmul.f32 %v2501, %v646
    %v2534 = vmul.f32 %v2502, %v649
    %v2535 = vmul.f32 %v2503, %v654
    %v2536 = vmul.f32 %v2504, %v657
    %v2537 = vmul.f32 %v2505, %v662
    %v2538 = vmul.f32 %v2506, %v665
    %v2539 = vsel %vm113, %v2507, 0.0
    %v2540 = vrot.slane %v2539, 4
    %v2541 = vadd.f32 %v2539, %v2540
    %v2542 = vrot.slane %v2541, 2
    %v2543 = vadd.f32 %v2541, %v2542
    %v2544 = vrot.slane %v2543, 1
    %v2545 = vadd.f32 %v2543, %v2544
    %v2546 = vsel %vm113, %v2508, 0.0
    %v2547 = vrot.slane %v2546, 4
    %v2548 = vadd.f32 %v2546, %v2547
    %v2549 = vrot.slane %v2548, 2
    %v2550 = vadd.f32 %v2548, %v2549
    %v2551 = vrot.slane %v2550, 1
    %v2552 = vadd.f32 %v2550, %v2551
    %v2553 = vsel %vm113, %v2509, 0.0
    %v2554 = vrot.slane %v2553, 4
    %v2555 = vadd.f32 %v2553, %v2554
    %v2556 = vrot.slane %v2555, 2
    %v2557 = vadd.f32 %v2555, %v2556
    %v2558 = vrot.slane %v2557, 1
    %v2559 = vadd.f32 %v2557, %v2558
    %v2560 = vsel %vm113, %v2510, 0.0
    %v2561 = vrot.slane %v2560, 4
    %v2562 = vadd.f32 %v2560, %v2561
    %v2563 = vrot.slane %v2562, 2
    %v2564 = vadd.f32 %v2562, %v2563
    %v2565 = vrot.slane %v2564, 1
    %v2566 = vadd.f32 %v2564, %v2565
    %v2567 = vsel %vm113, %v2511, 0.0
    %v2568 = vrot.slane %v2567, 4
    %v2569 = vadd.f32 %v2567, %v2568
    %v2570 = vrot.slane %v2569, 2
    %v2571 = vadd.f32 %v2569, %v2570
    %v2572 = vrot.slane %v2571, 1
    %v2573 = vadd.f32 %v2571, %v2572
    %v2574 = vsel %vm113, %v2512, 0.0
    %v2575 = vrot.slane %v2574, 4
    %v2576 = vadd.f32 %v2574, %v2575
    %v2577 = vrot.slane %v2576, 2
    %v2578 = vadd.f32 %v2576, %v2577
    %v2579 = vrot.slane %v2578, 1
    %v2580 = vadd.f32 %v2578, %v2579
    %v2581 = vsel %vm113, %v2513, 0.0
    %v2582 = vrot.slane %v2581, 4
    %v2583 = vadd.f32 %v2581, %v2582
    %v2584 = vrot.slane %v2583, 2
    %v2585 = vadd.f32 %v2583, %v2584
    %v2586 = vrot.slane %v2585, 1
    %v2587 = vadd.f32 %v2585, %v2586
    %v2588 = vsel %vm113, %v2514, 0.0
    %v2589 = vrot.slane %v2588, 4
    %v2590 = vadd.f32 %v2588, %v2589
    %v2591 = vrot.slane %v2590, 2
    %v2592 = vadd.f32 %v2590, %v2591
    %v2593 = vrot.slane %v2592, 1
    %v2594 = vadd.f32 %v2592, %v2593
    %v2595 = vsel %vm113, %v2515, 0.0
    %v2596 = vrot.slane %v2595, 4
    %v2597 = vadd.f32 %v2595, %v2596
    %v2598 = vrot.slane %v2597, 2
    %v2599 = vadd.f32 %v2597, %v2598
    %v2600 = vrot.slane %v2599, 1
    %v2601 = vadd.f32 %v2599, %v2600
    %v2602 = vsel %vm113, %v2516, 0.0
    %v2603 = vrot.slane %v2602, 4
    %v2604 = vadd.f32 %v2602, %v2603
    %v2605 = vrot.slane %v2604, 2
    %v2606 = vadd.f32 %v2604, %v2605
    %v2607 = vrot.slane %v2606, 1
    %v2608 = vadd.f32 %v2606, %v2607
    %v2609 = vsel %vm113, %v2517, 0.0
    %v2610 = vrot.slane %v2609, 4
    %v2611 = vadd.f32 %v2609, %v2610
    %v2612 = vrot.slane %v2611, 2
    %v2613 = vadd.f32 %v2611, %v2612
    %v2614 = vrot.slane %v2613, 1
    %v2615 = vadd.f32 %v2613, %v2614
    %v2616 = vsel %vm113, %v2518, 0.0
    %v2617 = vrot.slane %v2616, 4
    %v2618 = vadd.f32 %v2616, %v2617
    %v2619 = vrot.slane %v2618, 2
    %v2620 = vadd.f32 %v2618, %v2619
    %v2621 = vrot.slane %v2620, 1
    %v2622 = vadd.f32 %v2620, %v2621
    %v2623 = vsel %vm113, %v2519, 0.0
    %v2624 = vrot.slane %v2623, 4
    %v2625 = vadd.f32 %v2623, %v2624
    %v2626 = vrot.slane %v2625, 2
    %v2627 = vadd.f32 %v2625, %v2626
    %v2628 = vrot.slane %v2627, 1
    %v2629 = vadd.f32 %v2627, %v2628
    %v2630 = vsel %vm113, %v2520, 0.0
    %v2631 = vrot.slane %v2630, 4
    %v2632 = vadd.f32 %v2630, %v2631
    %v2633 = vrot.slane %v2632, 2
    %v2634 = vadd.f32 %v2632, %v2633
    %v2635 = vrot.slane %v2634, 1
    %v2636 = vadd.f32 %v2634, %v2635
    %v2637 = vsel %vm113, %v2521, 0.0
    %v2638 = vrot.slane %v2637, 4
    %v2639 = vadd.f32 %v2637, %v2638
    %v2640 = vrot.slane %v2639, 2
    %v2641 = vadd.f32 %v2639, %v2640
    %v2642 = vrot.slane %v2641, 1
    %v2643 = vadd.f32 %v2641, %v2642
    %v2644 = vsel %vm113, %v2522, 0.0
    %v2645 = vrot.slane %v2644, 4
    %v2646 = vadd.f32 %v2644, %v2645
    %v2647 = vrot.slane %v2646, 2
    %v2648 = vadd.f32 %v2646, %v2647
    %v2649 = vrot.slane %v2648, 1
    %v2650 = vadd.f32 %v2648, %v2649
    %v2651 = vsel %vm113, %v2523, 0.0
    %v2652 = vrot.slane %v2651, 4
    %v2653 = vadd.f32 %v2651, %v2652
    %v2654 = vrot.slane %v2653, 2
    %v2655 = vadd.f32 %v2653, %v2654
    %v2656 = vrot.slane %v2655, 1
    %v2657 = vadd.f32 %v2655, %v2656
    %v2658 = vsel %vm113, %v2524, 0.0
    %v2659 = vrot.slane %v2658, 4
    %v2660 = vadd.f32 %v2658, %v2659
    %v2661 = vrot.slane %v2660, 2
    %v2662 = vadd.f32 %v2660, %v2661
    %v2663 = vrot.slane %v2662, 1
    %v2664 = vadd.f32 %v2662, %v2663
    %v2665 = vsel %vm113, %v2525, 0.0
    %v2666 = vrot.slane %v2665, 4
    %v2667 = vadd.f32 %v2665, %v2666
    %v2668 = vrot.slane %v2667, 2
    %v2669 = vadd.f32 %v2667, %v2668
    %v2670 = vrot.slane %v2669, 1
    %v2671 = vadd.f32 %v2669, %v2670
    %v2672 = vsel %vm113, %v2526, 0.0
    %v2673 = vrot.slane %v2672, 4
    %v2674 = vadd.f32 %v2672, %v2673
    %v2675 = vrot.slane %v2674, 2
    %v2676 = vadd.f32 %v2674, %v2675
    %v2677 = vrot.slane %v2676, 1
    %v2678 = vadd.f32 %v2676, %v2677
    %v2679 = vsel %vm113, %v2527, 0.0
    %v2680 = vrot.slane %v2679, 4
    %v2681 = vadd.f32 %v2679, %v2680
    %v2682 = vrot.slane %v2681, 2
    %v2683 = vadd.f32 %v2681, %v2682
    %v2684 = vrot.slane %v2683, 1
    %v2685 = vadd.f32 %v2683, %v2684
    %v2686 = vsel %vm113, %v2528, 0.0
    %v2687 = vrot.slane %v2686, 4
    %v2688 = vadd.f32 %v2686, %v2687
    %v2689 = vrot.slane %v2688, 2
    %v2690 = vadd.f32 %v2688, %v2689
    %v2691 = vrot.slane %v2690, 1
    %v2692 = vadd.f32 %v2690, %v2691
    %v2693 = vsel %vm113, %v2529, 0.0
    %v2694 = vrot.slane %v2693, 4
    %v2695 = vadd.f32 %v2693, %v2694
    %v2696 = vrot.slane %v2695, 2
    %v2697 = vadd.f32 %v2695, %v2696
    %v2698 = vrot.slane %v2697, 1
    %v2699 = vadd.f32 %v2697, %v2698
    %v2700 = vsel %vm113, %v2530, 0.0
    %v2701 = vrot.slane %v2700, 4
    %v2702 = vadd.f32 %v2700, %v2701
    %v2703 = vrot.slane %v2702, 2
    %v2704 = vadd.f32 %v2702, %v2703
    %v2705 = vrot.slane %v2704, 1
    %v2706 = vadd.f32 %v2704, %v2705
    %v2707 = vsel %vm113, %v2531, 0.0
    %v2708 = vrot.slane %v2707, 4
    %v2709 = vadd.f32 %v2707, %v2708
    %v2710 = vrot.slane %v2709, 2
    %v2711 = vadd.f32 %v2709, %v2710
    %v2712 = vrot.slane %v2711, 1
    %v2713 = vadd.f32 %v2711, %v2712
    %v2714 = vsel %vm113, %v2532, 0.0
    %v2715 = vrot.slane %v2714, 4
    %v2716 = vadd.f32 %v2714, %v2715
    %v2717 = vrot.slane %v2716, 2
    %v2718 = vadd.f32 %v2716, %v2717
    %v2719 = vrot.slane %v2718, 1
    %v2720 = vadd.f32 %v2718, %v2719
    %v2721 = vsel %vm113, %v2533, 0.0
    %v2722 = vrot.slane %v2721, 4
    %v2723 = vadd.f32 %v2721, %v2722
    %v2724 = vrot.slane %v2723, 2
    %v2725 = vadd.f32 %v2723, %v2724
    %v2726 = vrot.slane %v2725, 1
    %v2727 = vadd.f32 %v2725, %v2726
    %v2728 = vsel %vm113, %v2534, 0.0
    %v2729 = vrot.slane %v2728, 4
    %v2730 = vadd.f32 %v2728, %v2729
    %v2731 = vrot.slane %v2730, 2
    %v2732 = vadd.f32 %v2730, %v2731
    %v2733 = vrot.slane %v2732, 1
    %v2734 = vadd.f32 %v2732, %v2733
    %v2735 = vsel %vm113, %v2535, 0.0
    %v2736 = vrot.slane %v2735, 4
    %v2737 = vadd.f32 %v2735, %v2736
    %v2738 = vrot.slane %v2737, 2
    %v2739 = vadd.f32 %v2737, %v2738
    %v2740 = vrot.slane %v2739, 1
    %v2741 = vadd.f32 %v2739, %v2740
    %v2742 = vsel %vm113, %v2536, 0.0
    %v2743 = vrot.slane %v2742, 4
    %v2744 = vadd.f32 %v2742, %v2743
    %v2745 = vrot.slane %v2744, 2
    %v2746 = vadd.f32 %v2744, %v2745
    %v2747 = vrot.slane %v2746, 1
    %v2748 = vadd.f32 %v2746, %v2747
    %v2749 = vsel %vm113, %v2537, 0.0
    %v2750 = vrot.slane %v2749, 4
    %v2751 = vadd.f32 %v2749, %v2750
    %v2752 = vrot.slane %v2751, 2
    %v2753 = vadd.f32 %v2751, %v2752
    %v2754 = vrot.slane %v2753, 1
    %v2755 = vadd.f32 %v2753, %v2754
    %v2756 = vsel %vm113, %v2538, 0.0
    %v2757 = vrot.slane %v2756, 4
    %v2758 = vadd.f32 %v2756, %v2757
    %v2759 = vrot.slane %v2758, 2
    %v2760 = vadd.f32 %v2758, %v2759
    %v2761 = vrot.slane %v2760, 1
    %v2762 = vadd.f32 %v2760, %v2761
    %v2763 = vpack.c.bf16 %v2545, %v2545
    %v2764 = vpack.c.bf16 %v2552, %v2552
    %v2765 = vpack.c.bf16 %v2559, %v2559
    %v2766 = vpack.c.bf16 %v2566, %v2566
    %v2767 = vpack.c.bf16 %v2573, %v2573
    %v2768 = vpack.c.bf16 %v2580, %v2580
    %v2769 = vpack.c.bf16 %v2587, %v2587
    %v2770 = vpack.c.bf16 %v2594, %v2594
    %v2771 = vpack.c.bf16 %v2601, %v2601
    %v2772 = vpack.c.bf16 %v2608, %v2608
    %v2773 = vpack.c.bf16 %v2615, %v2615
    %v2774 = vpack.c.bf16 %v2622, %v2622
    %v2775 = vpack.c.bf16 %v2629, %v2629
    %v2776 = vpack.c.bf16 %v2636, %v2636
    %v2777 = vpack.c.bf16 %v2643, %v2643
    %v2778 = vpack.c.bf16 %v2650, %v2650
    %v2779 = vpack.c.bf16 %v2657, %v2657
    %v2780 = vpack.c.bf16 %v2664, %v2664
    %v2781 = vpack.c.bf16 %v2671, %v2671
    %v2782 = vpack.c.bf16 %v2678, %v2678
    %v2783 = vpack.c.bf16 %v2685, %v2685
    %v2784 = vpack.c.bf16 %v2692, %v2692
    %v2785 = vpack.c.bf16 %v2699, %v2699
    %v2786 = vpack.c.bf16 %v2706, %v2706
    %v2787 = vpack.c.bf16 %v2713, %v2713
    %v2788 = vpack.c.bf16 %v2720, %v2720
    %v2789 = vpack.c.bf16 %v2727, %v2727
    %v2790 = vpack.c.bf16 %v2734, %v2734
    %v2791 = vpack.c.bf16 %v2741, %v2741
    %v2792 = vpack.c.bf16 %v2748, %v2748
    %v2793 = vpack.c.bf16 %v2755, %v2755
    %v2794 = vpack.c.bf16 %v2762, %v2762
    %v2795 = vld [vmem:[%s6] sm:$0xf]
    %v2796 = vld [vmem:[%s6 + $0x4] sm:$0xf]
    %v2797 = vld [vmem:[%s6 + $0x8] sm:$0xf]
    %v2798 = vld [vmem:[%s6 + $0xc] sm:$0xf]
    %v2831 = vunpack.c.l.b16 %v2763
    %v2832 = vunpack.c.l.b16 %v2764
    %v2833 = vunpack.c.l.b16 %v2765
    %v2834 = vunpack.c.l.b16 %v2766
    %v2835 = vunpack.c.l.b16 %v2767
    %v2836 = vunpack.c.l.b16 %v2768
    %v2837 = vunpack.c.l.b16 %v2769
    %v2838 = vunpack.c.l.b16 %v2770
    %v2839 = vunpack.c.l.b16 %v2771
    %v2840 = vunpack.c.l.b16 %v2772
    %v2841 = vunpack.c.l.b16 %v2773
    %v2842 = vunpack.c.l.b16 %v2774
    %v2843 = vunpack.c.l.b16 %v2775
    %v2844 = vunpack.c.l.b16 %v2776
    %v2845 = vunpack.c.l.b16 %v2777
    %v2846 = vunpack.c.l.b16 %v2778
    %v2847 = vunpack.c.l.b16 %v2779
    %v2848 = vunpack.c.l.b16 %v2780
    %v2849 = vunpack.c.l.b16 %v2781
    %v2850 = vunpack.c.l.b16 %v2782
    %v2851 = vunpack.c.l.b16 %v2783
    %v2852 = vunpack.c.l.b16 %v2784
    %v2853 = vunpack.c.l.b16 %v2785
    %v2854 = vunpack.c.l.b16 %v2786
    %v2855 = vunpack.c.l.b16 %v2787
    %v2856 = vunpack.c.l.b16 %v2788
    %v2857 = vunpack.c.l.b16 %v2789
    %v2858 = vunpack.c.l.b16 %v2790
    %v2859 = vunpack.c.l.b16 %v2791
    %v2860 = vunpack.c.l.b16 %v2792
    %v2861 = vunpack.c.l.b16 %v2793
    %v2862 = vunpack.c.l.b16 %v2794
    %vm2863 = vcmask 1041409
    %v2864 = vsel %vm2863, %v2832, %v2831
    %vm2865 = vcmask 1042434
    %v2866 = vsel %vm2865, %v2833, %v2864
    %vm2867 = vcmask 1043459
    %v2868 = vsel %vm2867, %v2834, %v2866
    %vm2869 = vcmask 1044484
    %v2870 = vsel %vm2869, %v2835, %v2868
    %vm2871 = vcmask 1045509
    %v2872 = vsel %vm2871, %v2836, %v2870
    %vm2873 = vcmask 1046534
    %v2874 = vsel %vm2873, %v2837, %v2872
    %vm2875 = vcmask 1047559
    %v2876 = vsel %vm2875, %v2838, %v2874
    %v2877 = vsel %vm2863, %v2840, %v2839
    %v2878 = vsel %vm2865, %v2841, %v2877
    %v2879 = vsel %vm2867, %v2842, %v2878
    %v2880 = vsel %vm2869, %v2843, %v2879
    %v2881 = vsel %vm2871, %v2844, %v2880
    %v2882 = vsel %vm2873, %v2845, %v2881
    %v2883 = vsel %vm2875, %v2846, %v2882
    %v2884 = vsel %vm2863, %v2848, %v2847
    %v2885 = vsel %vm2865, %v2849, %v2884
    %v2886 = vsel %vm2867, %v2850, %v2885
    %v2887 = vsel %vm2869, %v2851, %v2886
    %v2888 = vsel %vm2871, %v2852, %v2887
    %v2889 = vsel %vm2873, %v2853, %v2888
    %v2890 = vsel %vm2875, %v2854, %v2889
    %v2891 = vsel %vm2863, %v2856, %v2855
    %v2892 = vsel %vm2865, %v2857, %v2891
    %v2893 = vsel %vm2867, %v2858, %v2892
    %v2894 = vsel %vm2869, %v2859, %v2893
    %v2895 = vsel %vm2871, %v2860, %v2894
    %v2896 = vsel %vm2873, %v2861, %v2895
    %v2897 = vsel %vm2875, %v2862, %v2896
    %v2898 = vpack.c.b16 %v2883, %v2876
    %v2899 = vpack.c.b16 %v2897, %v2890
    %v2904 = vunpack.c.l.b16 %v2795
    %v2905 = vunpack.c.l.b16 %v2796
    %v2906 = vunpack.c.l.b16 %v2797
    %v2907 = vunpack.c.l.b16 %v2798
    %v2908 = vpack.c.b16 %v2905, %v2904
    %v2909 = vpack.c.b16 %v2907, %v2906
    %v2913 = vsel %vm113, %v2898, 0
    %v2916 = vsel %vm113, %v2899, 0
    %2918 = vmatprep.subr.bf16.mxu0 0
    %2919 = vmatpush1.bf16.msra.mxu0 0
    %2920 = vmatprep.subr.bf16.mxu0 0
    %2921 = vmatpush1.bf16.msra.mxu0 0
    %2922 = vmatprep.subr.bf16.mxu0 0
    %2923 = vmatpush1.bf16.msra.mxu0 0
    %2924 = vmatprep.subr.bf16.mxu0 0
    %2925 = vmatpush1.bf16.msra.mxu0 0
    %2926 = vmatprep.subr.bf16.mxu0 0
    %2927 = vmatpush1.bf16.msra.mxu0 0
    %2928 = vmatprep.subr.bf16.mxu0 0
    %2929 = vmatpush1.bf16.msra.mxu0 0
    %2930 = vmatprep.subr.bf16.mxu0 0
    %2931 = vmatpush1.bf16.msra.mxu0 %v2909
    %2932 = vmatprep.subr.bf16.mxu0 0
    %2933 = vmatpush1.bf16.msra.mxu0 %v2908
    %2934 = vmatprep.subr.bf16.mxu0 0
    %2935 = vmatpush2.bf16.msra.mxu0 0
    %2936 = vmatprep.subr.bf16.mxu0 0
    %2937 = vmatpush2.bf16.msra.mxu0 0
    %2938 = vmatprep.subr.bf16.mxu0 0
    %2939 = vmatpush2.bf16.msra.mxu0 0
    %2940 = vmatprep.subr.bf16.mxu0 0
    %2941 = vmatpush2.bf16.msra.mxu0 0
    %2942 = vmatprep.subr.bf16.mxu0 0
    %2943 = vmatpush2.bf16.msra.mxu0 0
    %2944 = vmatprep.subr.bf16.mxu0 0
    %2945 = vmatpush2.bf16.msra.mxu0 0
    %2946 = vmatprep.subr.bf16.mxu0 0
    %2947 = vmatpush2.bf16.msra.mxu0 0
    %2948 = vmatprep.subr.bf16.mxu0 0
    %2949 = vmatpush2.bf16.msra.mxu0 0
    %2950 = vmatprep.mubr.bf16.mxu0 0
    %2951 = vmatmul.mubr.bf16.gmra.mxu0 %v2913
    %v2952 = vpop.f32.mrf.mxu0
    %v2953 = vadd.f32 0.0, %v2952
    %v2954 = vpop.f32.mrf.mxu0
    %v2955 = vpop.f32.mrf.mxu0
    %v2956 = vadd.f32 0.0, %v2955
    %v2957 = vpop.f32.mrf.mxu0
    %2958 = vmatprep.mubr.bf16.mxu0 0
    %2959 = vmatmul.mubr.bf16.gmra.mxu0 %v2916
    %v2960 = vpop.f32.mrf.mxu0
    %v2961 = vadd.f32 0.0, %v2960
    %v2962 = vpop.f32.mrf.mxu0
    %v2963 = vpop.f32.mrf.mxu0
    %v2964 = vadd.f32 0.0, %v2963
    %v2965 = vpop.f32.mrf.mxu0
    %2966 = vdwg.mxu0
    %v2967 = vpack.c.bf16 %v2956, %v2953
    %v2968 = vpack.c.bf16 %v2964, %v2961
    %v2970 = vrot.slane %v2967, 4
    %2971 = vrot.lane.b32.xlu0 %v2970, 32
    %v2972 = vpop.permute.xlu0 %2971
    %2974 = vrot.lane.b32.xlu0 %v2968, 64
    %v2975 = vpop.permute.xlu0 %2974
    %v2976 = vrot.slane %v2968, 4
    %2977 = vrot.lane.b32.xlu0 %v2976, 96
    %v2978 = vpop.permute.xlu0 %2977
    %v2981 = vsel %vm113, %v2967, %v2972
    %vm2982 = vcmask 523264
    %v2984 = vsel %vm2982, %v2981, %v2975
    %vm2985 = vcmask 785408
    %v2987 = vsel %vm2985, %v2984, %v2978
    %2989 = vst [vmem:[#allocation5] sm:$0xf] %v2987
    // Predicated region
    $region38: #{tpu_custom_call.1} parent=1 // pred_check
      _
    $region39: #{tpu_custom_call.1} parent=1 // pred_check_branch
      %2991 = sbr.rel (0) target = $region41
    $region40: #{tpu_custom_call.1} parent=1 // pred_region
      %s2993 = ssub.s32 64, 64
      %2994 = vsyncadd [#allocation4], %s2993
      %s2996 = sshll.u32 [#allocation5], 4
      %s2997 = int_to_ptr.vmem [resolvable:$true] %s2996
      %2999 = dma.vmem_to_hbm [thread:$0]  %s2997, 64, %s8, [#allocation4]
    $region41: #{tpu_custom_call.1} parent=1 // pred_fallthru
      _
    // Predicated region
    $region42: #{tpu_custom_call.1} parent=1 // pred_check
      _
    $region43: #{tpu_custom_call.1} parent=1 // pred_check_branch
      %3001 = sbr.rel (0) target = $region45
    $region44: #{tpu_custom_call.1} parent=1 // pred_region
      %3002 = dma.done [#allocation4], 64
    $region45: #{tpu_custom_call.1} parent=1 // pred_fallthru
      _
    %3003 = vsyncpa [#allocation3], 1
    %3004 = vsyncpa [#allocation4], 1

</llo_original>
